<compile_context>
chip_gen: v7x
topology: tpu7x:2x2x1
jax: 0.10.0
libtpu: 0.0.40
codegen_flags: <defaults>
</compile_context>

<pallas_src>
import functools

import jax
import jax.numpy as jnp
from jax.experimental import pallas as pl
from jax.experimental.pallas import tpu as pltpu


def _linear_combine_kernel(
    gamma_ref,                 # SMEM (1,) f32 : raw gamma parameter
    main_ref, aux_ref,         # VMEM (tm, H) compute-dtype
    w_am1_ref, b_am1_ref,      # (H, H2+H) cd , (1, H2+H) f32   [w_a1 | w_m1]
    w_a2_ref, b_a2_ref,        # (H2, H) cd   , (1, H) f32
    w_f1_ref, b_f1_ref,        # (H, H) cd    , (1, H) f32
    w_f2_ref, b_f2_ref,        # (H, Cp) cd   , (1, Cp) f32
    w_m2_ref, b_m2_ref,        # (H, Cp) cd   , (1, Cp) f32
    out_ref,                   # (tm, Cp) f32
    *, h2,
):
    f32 = jnp.float32
    cd = w_am1_ref.dtype                      # MXU operand dtype (bf16 or f32)
    main_cd = main_ref[...]                   # compute dtype
    aux_cd = aux_ref[...]
    h = main_cd.shape[-1]

    # ---- fused first layer for attention + main classifier (shared input) ----
    ham = jnp.dot(main_cd, w_am1_ref[...],
                  preferred_element_type=f32) + b_am1_ref[...]
    ham = jnp.maximum(ham, 0.0)
    h_att = ham[:, :h2]                       # (tm, H//2) attention hidden
    hm = ham[:, h2:]                          # (tm, H)    main-classifier hidden

    # ---- attention second layer + sigmoid ----
    att = jax.nn.sigmoid(
        jnp.dot(h_att.astype(cd), w_a2_ref[...],
                preferred_element_type=f32) + b_a2_ref[...])

    # ---- fuse modalities (f32 element-wise math) ----
    fused = main_cd.astype(f32) + att * aux_cd.astype(f32)

    # ---- fused classifier first layer (Dropout = identity at inference) ----
    # TODO(synk): nn.Dropout(p=0.2) is a no-op in eval mode; no RNG mask emitted.
    hf = jnp.maximum(
        jnp.dot(fused.astype(cd), w_f1_ref[...],
                preferred_element_type=f32) + b_f1_ref[...], 0.0)

    # ---- gated combination: two accumulating MXU calls, no VMEM scratch ----
    g = jax.nn.sigmoid(gamma_ref[0])          # scalar, from SMEM
    logits = (
        jnp.dot((g * hf).astype(cd), w_f2_ref[...], preferred_element_type=f32)
        + jnp.dot(((1.0 - g) * hm).astype(cd), w_m2_ref[...],
                  preferred_element_type=f32)
        + (g * b_f2_ref[...] + (1.0 - g) * b_m2_ref[...]))
    out_ref[...] = logits.astype(out_ref.dtype)


def _infer_num_tensorcores() -> int:
    """1 TensorCore/chip on v2-v6e; 2 on v7x. Conservative fallback = 1."""
    try:
        kind = jax.devices()[0].device_kind.lower()
    except Exception:
        return 1
    return 2 if "v7" in kind else 1


def _round_up(x: int, m: int) -> int:
    return ((x + m - 1) // m) * m


def _choose_grid(B: int, num_cores: int):
    """Return (tile_m, grid_m, Bp). Prefers tiles that divide B (no jnp.pad)."""
    if num_cores <= 1:
        # v5e/v6e: the grid is a serial loop on one TC -> one big step
        # amortizes the ~0.35 us fixed per-step cost.
        max_tile = 1024
        if B <= max_tile:
            return B, 1, B
        for tm in range(max_tile, 7, -8):         # divisor of B, multiple of 8
            if B % tm == 0:
                return tm, B // tm, B
        g = pl.cdiv(B, max_tile)
        tm = _round_up(pl.cdiv(B, g), 8)
        return tm, g, g * tm
    # v7x megacore: even number of "parallel" steps so both TCs stay busy.
    max_tile = 512                                # budget against 64 MiB/TC VMEM
    if B <= 16:
        return B, 1, B
    if B % 16 == 0 and B // 2 <= max_tile:        # exactly two tiles, no padding
        return B // 2, 2, B
    for g in range(2, B + 1, 2):                  # even divisor, tile mult. of 8
        if B % g == 0 and (B // g) % 8 == 0 and B // g <= max_tile:
            return B // g, g, B
    g = max(2, 2 * pl.cdiv(B, 2 * max_tile))      # fallback: minimal padding
    tm = _round_up(pl.cdiv(B, g), 8)
    return tm, g, g * tm


def linear_combine(main_features, aux_features, params, *, tile_m=None,
                   compute_dtype=jnp.bfloat16, num_cores=None):
    """Pallas forward pass of LinearCombine.

    main_features, aux_features: (B, H) float32
    params: dict with weights (in, out), biases (1, out), gamma (1, 1)
    compute_dtype: dtype for MXU operands / activation transfer (bf16 default);
                   element-wise math and accumulation stay in f32.

    Note: weight concat/cast/pad below is cheap, one-shot prep; in a real model
    jit this wrapper (or pre-bake the params) so XLA constant-folds it.
    """
    B, H = main_features.shape
    H2 = params["w_a1"].shape[1]
    C = params["w_f2"].shape[1]
    Cp = _round_up(C, 128)                    # lane-dense output block

    if num_cores is None:
        num_cores = _infer_num_tensorcores()
    if tile_m is None:
        tile_m, grid_m, Bp = _choose_grid(B, num_cores)
    else:
        grid_m = pl.cdiv(B, tile_m)
        Bp = grid_m * tile_m

    cd = compute_dtype
    f32 = jnp.float32

    main_in = main_features.astype(cd)
    aux_in = aux_features.astype(cd)
    if Bp != B:                               # only when no dividing tile exists
        pad = ((0, Bp - B), (0, 0))
        main_in = jnp.pad(main_in, pad)
        aux_in = jnp.pad(aux_in, pad)

    # Fused first-layer weights (shared input): [w_a1 | w_m1].
    w_am1 = jnp.concatenate([params["w_a1"], params["w_m1"]], axis=1).astype(cd)
    b_am1 = jnp.concatenate([params["b_a1"], params["b_m1"]], axis=1).astype(f32)
    w_a2 = params["w_a2"].astype(cd)
    b_a2 = params["b_a2"].astype(f32)
    w_f1 = params["w_f1"].astype(cd)
    b_f1 = params["b_f1"].astype(f32)
    w_f2p = jnp.pad(params["w_f2"], ((0, 0), (0, Cp - C))).astype(cd)
    w_m2p = jnp.pad(params["w_m2"], ((0, 0), (0, Cp - C))).astype(cd)
    b_f2p = jnp.pad(params["b_f2"], ((0, 0), (0, Cp - C))).astype(f32)
    b_m2p = jnp.pad(params["b_m2"], ((0, 0), (0, Cp - C))).astype(f32)
    gamma = params["gamma"].reshape((1,)).astype(f32)

    def full_spec(arr):  # grid-invariant weights/biases, resident in VMEM
        return pl.BlockSpec(arr.shape, lambda i: (0, 0))

    in_specs = [
        pl.BlockSpec(memory_space=pltpu.MemorySpace.SMEM),   # gamma (scalar)
        pl.BlockSpec((tile_m, H), lambda i: (i, 0)),          # main
        pl.BlockSpec((tile_m, H), lambda i: (i, 0)),          # aux
        full_spec(w_am1), full_spec(b_am1),
        full_spec(w_a2), full_spec(b_a2),
        full_spec(w_f1), full_spec(b_f1),
        full_spec(w_f2p), full_spec(b_f2p),
        full_spec(w_m2p), full_spec(b_m2p),
    ]

    operands = (gamma, main_in, aux_in,
                w_am1, b_am1, w_a2, b_a2, w_f1, b_f1,
                w_f2p, b_f2p, w_m2p, b_m2p)

    # Advisory cost estimate so XLA schedules the custom call sensibly.
    flops = 2 * Bp * (H * (H2 + H) + H2 * H + H * H + 2 * H * Cp)
    transcendentals = Bp * H + grid_m                    # att sigmoids + gamma/step
    bytes_accessed = (sum(int(a.size) * a.dtype.itemsize for a in operands)
                      + Bp * Cp * 4)

    out = pl.pallas_call(
        functools.partial(_linear_combine_kernel, h2=H2),
        out_shape=jax.ShapeDtypeStruct((Bp, Cp), jnp.float32),
        grid_spec=pltpu.PrefetchScalarGridSpec(
            num_scalar_prefetch=0,
            grid=(grid_m,),
            in_specs=in_specs,
            out_specs=pl.BlockSpec((tile_m, Cp), lambda i: (i, 0)),
        ),
        compiler_params=pltpu.CompilerParams(
            dimension_semantics=("parallel",),
        ),
        cost_estimate=pl.CostEstimate(
            flops=flops,
            transcendentals=transcendentals,
            bytes_accessed=bytes_accessed),
    )(*operands)

    return out[:B, :C]


def _reference(main, aux, p):
    def lin(x, w, b):
        return x @ w + b
    h = jnp.maximum(lin(main, p["w_a1"], p["b_a1"]), 0.0)
    att = jax.nn.sigmoid(lin(h, p["w_a2"], p["b_a2"]))
    fused = main + att * aux
    hf = jnp.maximum(lin(fused, p["w_f1"], p["b_f1"]), 0.0)
    fused_logit = lin(hf, p["w_f2"], p["b_f2"])
    hm = jnp.maximum(lin(main, p["w_m1"], p["b_m1"]), 0.0)
    main_logit = lin(hm, p["w_m2"], p["b_m2"])
    g = jax.nn.sigmoid(p["gamma"][0, 0])
    return g * fused_logit + (1.0 - g) * main_logit


def init_params(key, hidden_dim=256, num_classes=10):
    H, C = hidden_dim, num_classes
    ks = jax.random.split(key, 12)
    def w(k, i, o):
        return jax.random.normal(k, (i, o), jnp.float32) * 0.05
    def b(k, o):
        return jax.random.normal(k, (1, o), jnp.float32) * 0.01
    return {
        "w_a1": w(ks[0], H, H // 2), "b_a1": b(ks[1], H // 2),
        "w_a2": w(ks[2], H // 2, H), "b_a2": b(ks[3], H),
        "w_f1": w(ks[4], H, H),      "b_f1": b(ks[5], H),
        "w_f2": w(ks[6], H, C),      "b_f2": b(ks[7], C),
        "w_m1": w(ks[8], H, H),      "b_m1": b(ks[9], H),
        "w_m2": w(ks[10], H, C),     "b_m2": b(ks[11], C),
        "gamma": jnp.full((1, 1), 0.3, jnp.float32),
    }


if __name__ == "__main__":
    key = jax.random.PRNGKey(0)
    k_main, k_aux, k_p = jax.random.split(key, 3)

    # Small batch, module-default hidden_dim (256) / num_classes=10.
    B, H, C = 32, 256, 10
    main_features = jax.random.normal(k_main, (B, H), jnp.float32)
    aux_features = jax.random.normal(k_aux, (B, H), jnp.float32)
    params = init_params(k_p, hidden_dim=H, num_classes=C)

    ref = _reference(main_features, aux_features, params)

    # f32 MXU path: the fused restructuring must match the reference tightly.
    out_f32 = jax.block_until_ready(
        linear_combine(main_features, aux_features, params,
                       compute_dtype=jnp.float32))
    assert out_f32.shape == (B, C)
    assert jnp.allclose(out_f32, ref, atol=1e-4, rtol=1e-4), "f32 mismatch vs reference"

    # bf16 MXU path (default, fast on v5e/v6e/v7x): relaxed tolerance.
    out_bf16 = jax.block_until_ready(
        linear_combine(main_features, aux_features, params))
    assert out_bf16.shape == (B, C)
    assert jnp.allclose(out_bf16, ref, atol=5e-2, rtol=5e-2), "bf16 mismatch vs reference"

    print("KERNEL_OK")
</pallas_src>

<mosaic_0001>
module attributes {stable_mosaic.version = 11 : i64} {
  func.func @_linear_combine_kernel(%arg0: i32, %arg1: memref<1xf32, #tpu.memory_space<smem>>, %arg2: memref<32x256xf32, #tpu.memory_space<vmem>>, %arg3: memref<32x256xf32, #tpu.memory_space<vmem>>, %arg4: memref<256x384xf32, #tpu.memory_space<vmem>>, %arg5: memref<1x384xf32, #tpu.memory_space<vmem>>, %arg6: memref<128x256xf32, #tpu.memory_space<vmem>>, %arg7: memref<1x256xf32, #tpu.memory_space<vmem>>, %arg8: memref<256x256xf32, #tpu.memory_space<vmem>>, %arg9: memref<1x256xf32, #tpu.memory_space<vmem>>, %arg10: memref<256x128xf32, #tpu.memory_space<vmem>>, %arg11: memref<1x128xf32, #tpu.memory_space<vmem>>, %arg12: memref<256x128xf32, #tpu.memory_space<vmem>>, %arg13: memref<1x128xf32, #tpu.memory_space<vmem>>, %arg14: memref<32x128xf32, #tpu.memory_space<vmem>>) attributes {dimension_semantics = [#tpu.dimension_semantics<parallel>], iteration_bounds = array<i64: 1>, scalar_prefetch = 0 : i64, scratch_operands = 0 : i64, tpu.core_type = #tpu.core_type<tc>, window_params = [{transform_indices = @transform_0, window_bounds = array<i64: 1>}, {transform_indices = @transform_1, window_bounds = array<i64: 32, 256>}, {transform_indices = @transform_2, window_bounds = array<i64: 32, 256>}, {pipeline_mode = #tpu.pipeline_mode<synchronous>, transform_indices = @transform_3, window_bounds = array<i64: 256, 384>}, {pipeline_mode = #tpu.pipeline_mode<synchronous>, transform_indices = @transform_4, window_bounds = array<i64: 1, 384>}, {pipeline_mode = #tpu.pipeline_mode<synchronous>, transform_indices = @transform_5, window_bounds = array<i64: 128, 256>}, {pipeline_mode = #tpu.pipeline_mode<synchronous>, transform_indices = @transform_6, window_bounds = array<i64: 1, 256>}, {pipeline_mode = #tpu.pipeline_mode<synchronous>, transform_indices = @transform_7, window_bounds = array<i64: 256, 256>}, {pipeline_mode = #tpu.pipeline_mode<synchronous>, transform_indices = @transform_8, window_bounds = array<i64: 1, 256>}, {pipeline_mode = #tpu.pipeline_mode<synchronous>, transform_indices = @transform_9, window_bounds = array<i64: 256, 128>}, {pipeline_mode = #tpu.pipeline_mode<synchronous>, transform_indices = @transform_10, window_bounds = array<i64: 1, 128>}, {pipeline_mode = #tpu.pipeline_mode<synchronous>, transform_indices = @transform_11, window_bounds = array<i64: 256, 128>}, {pipeline_mode = #tpu.pipeline_mode<synchronous>, transform_indices = @transform_12, window_bounds = array<i64: 1, 128>}, {transform_indices = @transform_13, window_bounds = array<i64: 32, 128>}]} {
    %c0 = arith.constant 0 : index
    %c0_0 = arith.constant 0 : index
    %0 = vector.load %arg2[%c0, %c0_0] : memref<32x256xf32, #tpu.memory_space<vmem>>, vector<32x256xf32>
    %c0_1 = arith.constant 0 : index
    %c0_2 = arith.constant 0 : index
    %1 = vector.load %arg3[%c0_1, %c0_2] : memref<32x256xf32, #tpu.memory_space<vmem>>, vector<32x256xf32>
    %c0_3 = arith.constant 0 : index
    %c0_4 = arith.constant 0 : index
    %2 = vector.load %arg4[%c0_3, %c0_4] : memref<256x384xf32, #tpu.memory_space<vmem>>, vector<256x384xf32>
    %cst = arith.constant dense<0.000000e+00> : vector<32x384xf32>
    %3 = tpu.matmul %0, %2, %cst {dimension_numbers = #tpu.dot_dimension_numbers<[1], [0], [0], [1], [0, 0, 1, 1], [], []>} : vector<32x256xf32>, vector<256x384xf32>, vector<32x384xf32> -> vector<32x384xf32>
    %c0_5 = arith.constant 0 : index
    %c0_6 = arith.constant 0 : index
    %4 = vector.load %arg5[%c0_5, %c0_6] : memref<1x384xf32, #tpu.memory_space<vmem>>, vector<1x384xf32>
    %5 = vector.broadcast %4 : vector<1x384xf32> to vector<32x384xf32>
    %6 = arith.addf %3, %5 : vector<32x384xf32>
    %cst_7 = arith.constant 0.000000e+00 : f32
    %7 = vector.broadcast %cst_7 : f32 to vector<32x384xf32>
    %8 = arith.maximumf %6, %7 : vector<32x384xf32>
    %9 = vector.extract_strided_slice %8 {offsets = [0, 0], sizes = [32, 128], strides = [1, 1]} : vector<32x384xf32> to vector<32x128xf32>
    %10 = vector.extract_strided_slice %8 {offsets = [0, 128], sizes = [32, 256], strides = [1, 1]} : vector<32x384xf32> to vector<32x256xf32>
    %c0_8 = arith.constant 0 : index
    %c0_9 = arith.constant 0 : index
    %11 = vector.load %arg6[%c0_8, %c0_9] : memref<128x256xf32, #tpu.memory_space<vmem>>, vector<128x256xf32>
    %cst_10 = arith.constant dense<0.000000e+00> : vector<32x256xf32>
    %12 = tpu.matmul %9, %11, %cst_10 {dimension_numbers = #tpu.dot_dimension_numbers<[1], [0], [0], [1], [0, 0, 1, 1], [], []>} : vector<32x128xf32>, vector<128x256xf32>, vector<32x256xf32> -> vector<32x256xf32>
    %c0_11 = arith.constant 0 : index
    %c0_12 = arith.constant 0 : index
    %13 = vector.load %arg7[%c0_11, %c0_12] : memref<1x256xf32, #tpu.memory_space<vmem>>, vector<1x256xf32>
    %14 = vector.broadcast %13 : vector<1x256xf32> to vector<32x256xf32>
    %15 = arith.addf %12, %14 : vector<32x256xf32>
    %16 = arith.negf %15 : vector<32x256xf32>
    %17 = math.exp %16 : vector<32x256xf32>
    %cst_13 = arith.constant 1.000000e+00 : f32
    %18 = vector.broadcast %cst_13 : f32 to vector<32x256xf32>
    %19 = arith.addf %18, %17 : vector<32x256xf32>
    %20 = arith.divf %18, %19 : vector<32x256xf32>
    %21 = arith.mulf %20, %1 : vector<32x256xf32>
    %22 = arith.addf %0, %21 : vector<32x256xf32>
    %c0_14 = arith.constant 0 : index
    %c0_15 = arith.constant 0 : index
    %23 = vector.load %arg8[%c0_14, %c0_15] : memref<256x256xf32, #tpu.memory_space<vmem>>, vector<256x256xf32>
    %cst_16 = arith.constant dense<0.000000e+00> : vector<32x256xf32>
    %24 = tpu.matmul %22, %23, %cst_16 {dimension_numbers = #tpu.dot_dimension_numbers<[1], [0], [0], [1], [0, 0, 1, 1], [], []>} : vector<32x256xf32>, vector<256x256xf32>, vector<32x256xf32> -> vector<32x256xf32>
    %c0_17 = arith.constant 0 : index
    %c0_18 = arith.constant 0 : index
    %25 = vector.load %arg9[%c0_17, %c0_18] : memref<1x256xf32, #tpu.memory_space<vmem>>, vector<1x256xf32>
    %26 = vector.broadcast %25 : vector<1x256xf32> to vector<32x256xf32>
    %27 = arith.addf %24, %26 : vector<32x256xf32>
    %cst_19 = arith.constant 0.000000e+00 : f32
    %28 = vector.broadcast %cst_19 : f32 to vector<32x256xf32>
    %29 = arith.maximumf %27, %28 : vector<32x256xf32>
    %c0_20 = arith.constant 0 : index
    %30 = memref.load %arg1[%c0_20] : memref<1xf32, #tpu.memory_space<smem>>
    %31 = arith.negf %30 : f32
    %32 = math.exp %31 : f32
    %cst_21 = arith.constant 1.000000e+00 : f32
    %33 = arith.addf %cst_21, %32 : f32
    %34 = arith.divf %cst_21, %33 : f32
    %35 = vector.broadcast %34 : f32 to vector<32x256xf32>
    %36 = arith.mulf %35, %29 : vector<32x256xf32>
    %c0_22 = arith.constant 0 : index
    %c0_23 = arith.constant 0 : index
    %37 = vector.load %arg10[%c0_22, %c0_23] : memref<256x128xf32, #tpu.memory_space<vmem>>, vector<256x128xf32>
    %cst_24 = arith.constant dense<0.000000e+00> : vector<32x128xf32>
    %38 = tpu.matmul %36, %37, %cst_24 {dimension_numbers = #tpu.dot_dimension_numbers<[1], [0], [0], [1], [0, 0, 1, 1], [], []>} : vector<32x256xf32>, vector<256x128xf32>, vector<32x128xf32> -> vector<32x128xf32>
    %cst_25 = arith.constant 1.000000e+00 : f32
    %39 = arith.subf %cst_25, %34 : f32
    %40 = vector.broadcast %39 : f32 to vector<32x256xf32>
    %41 = arith.mulf %40, %10 : vector<32x256xf32>
    %c0_26 = arith.constant 0 : index
    %c0_27 = arith.constant 0 : index
    %42 = vector.load %arg12[%c0_26, %c0_27] : memref<256x128xf32, #tpu.memory_space<vmem>>, vector<256x128xf32>
    %cst_28 = arith.constant dense<0.000000e+00> : vector<32x128xf32>
    %43 = tpu.matmul %41, %42, %cst_28 {dimension_numbers = #tpu.dot_dimension_numbers<[1], [0], [0], [1], [0, 0, 1, 1], [], []>} : vector<32x256xf32>, vector<256x128xf32>, vector<32x128xf32> -> vector<32x128xf32>
    %44 = arith.addf %38, %43 : vector<32x128xf32>
    %c0_29 = arith.constant 0 : index
    %c0_30 = arith.constant 0 : index
    %45 = vector.load %arg11[%c0_29, %c0_30] : memref<1x128xf32, #tpu.memory_space<vmem>>, vector<1x128xf32>
    %46 = vector.broadcast %34 : f32 to vector<1x128xf32>
    %47 = arith.mulf %46, %45 : vector<1x128xf32>
    %cst_31 = arith.constant 1.000000e+00 : f32
    %48 = arith.subf %cst_31, %34 : f32
    %c0_32 = arith.constant 0 : index
    %c0_33 = arith.constant 0 : index
    %49 = vector.load %arg13[%c0_32, %c0_33] : memref<1x128xf32, #tpu.memory_space<vmem>>, vector<1x128xf32>
    %50 = vector.broadcast %48 : f32 to vector<1x128xf32>
    %51 = arith.mulf %50, %49 : vector<1x128xf32>
    %52 = arith.addf %47, %51 : vector<1x128xf32>
    %53 = vector.broadcast %52 : vector<1x128xf32> to vector<32x128xf32>
    %54 = arith.addf %44, %53 : vector<32x128xf32>
    %c0_34 = arith.constant 0 : index
    %c0_35 = arith.constant 0 : index
    %55 = vector.load %arg14[%c0_34, %c0_35] : memref<32x128xf32, #tpu.memory_space<vmem>>, vector<32x128xf32>
    tpu.vector_store %arg14[%c0_34, %c0_35], %54 {strides = array<i32>} : memref<32x128xf32, #tpu.memory_space<vmem>>, vector<32x128xf32>,
    return
  }
  func.func @transform_0(%arg0: i32) -> i32 {
    %c0_i32 = arith.constant 0 : i32
    %c0_i32_0 = arith.constant 0 : i32
    return %c0_i32 : i32
  }
  func.func @transform_1(%arg0: i32) -> (i32, i32) {
    %c0_i32 = arith.constant 0 : i32
    %c0_i32_0 = arith.constant 0 : i32
    return %arg0, %c0_i32 : i32, i32
  }
  func.func @transform_2(%arg0: i32) -> (i32, i32) {
    %c0_i32 = arith.constant 0 : i32
    %c0_i32_0 = arith.constant 0 : i32
    return %arg0, %c0_i32 : i32, i32
  }
  func.func @transform_3(%arg0: i32) -> (i32, i32) {
    %c0_i32 = arith.constant 0 : i32
    %c0_i32_0 = arith.constant 0 : i32
    %c0_i32_1 = arith.constant 0 : i32
    return %c0_i32, %c0_i32_0 : i32, i32
  }
  func.func @transform_4(%arg0: i32) -> (i32, i32) {
    %c0_i32 = arith.constant 0 : i32
    %c0_i32_0 = arith.constant 0 : i32
    %c0_i32_1 = arith.constant 0 : i32
    return %c0_i32, %c0_i32_0 : i32, i32
  }
  func.func @transform_5(%arg0: i32) -> (i32, i32) {
    %c0_i32 = arith.constant 0 : i32
    %c0_i32_0 = arith.constant 0 : i32
    %c0_i32_1 = arith.constant 0 : i32
    return %c0_i32, %c0_i32_0 : i32, i32
  }
  func.func @transform_6(%arg0: i32) -> (i32, i32) {
    %c0_i32 = arith.constant 0 : i32
    %c0_i32_0 = arith.constant 0 : i32
    %c0_i32_1 = arith.constant 0 : i32
    return %c0_i32, %c0_i32_0 : i32, i32
  }
  func.func @transform_7(%arg0: i32) -> (i32, i32) {
    %c0_i32 = arith.constant 0 : i32
    %c0_i32_0 = arith.constant 0 : i32
    %c0_i32_1 = arith.constant 0 : i32
    return %c0_i32, %c0_i32_0 : i32, i32
  }
  func.func @transform_8(%arg0: i32) -> (i32, i32) {
    %c0_i32 = arith.constant 0 : i32
    %c0_i32_0 = arith.constant 0 : i32
    %c0_i32_1 = arith.constant 0 : i32
    return %c0_i32, %c0_i32_0 : i32, i32
  }
  func.func @transform_9(%arg0: i32) -> (i32, i32) {
    %c0_i32 = arith.constant 0 : i32
    %c0_i32_0 = arith.constant 0 : i32
    %c0_i32_1 = arith.constant 0 : i32
    return %c0_i32, %c0_i32_0 : i32, i32
  }
  func.func @transform_10(%arg0: i32) -> (i32, i32) {
    %c0_i32 = arith.constant 0 : i32
    %c0_i32_0 = arith.constant 0 : i32
    %c0_i32_1 = arith.constant 0 : i32
    return %c0_i32, %c0_i32_0 : i32, i32
  }
  func.func @transform_11(%arg0: i32) -> (i32, i32) {
    %c0_i32 = arith.constant 0 : i32
    %c0_i32_0 = arith.constant 0 : i32
    %c0_i32_1 = arith.constant 0 : i32
    return %c0_i32, %c0_i32_0 : i32, i32
  }
  func.func @transform_12(%arg0: i32) -> (i32, i32) {
    %c0_i32 = arith.constant 0 : i32
    %c0_i32_0 = arith.constant 0 : i32
    %c0_i32_1 = arith.constant 0 : i32
    return %c0_i32, %c0_i32_0 : i32, i32
  }
  func.func @transform_13(%arg0: i32) -> (i32, i32) {
    %c0_i32 = arith.constant 0 : i32
    %c0_i32_0 = arith.constant 0 : i32
    return %arg0, %c0_i32 : i32, i32
  }
}

</mosaic_0001>

<llo_original>
// kernel: tpu_custom_call.1
$region0: #{tpu_custom_call.1}
  #allocation0 [shape = 'u32[]', space=smem, size = 0x4, offset = 0x4, fixed_abs, tag = 'smem constant byte address 0x4 - core index']
  #allocation1 [shape = 'u32[144,128]{1,0:T(1,128)}', space=vmem, size = 0x12000, scoped, tag = 'internal scratch']
  #allocation2 [shape = 'f32[1]{0:T(128)S(6)}', space=smem, size = 0x200, scoped, tag = 'scoped memory for tpu_custom_call.1']
  %s0 = inlined_call_operand.<no memory space> [shape: f32[1], index: 0, kind: input, shape index: {}]
  %s1 = inlined_call_operand.hbm [shape: f32[32,256], index: 1, kind: input, shape index: {}]
  %s2 = inlined_call_operand.hbm [shape: f32[32,256], index: 2, kind: input, shape index: {}]
  %s3 = inlined_call_operand.hbm [shape: f32[256,384], index: 3, kind: input, shape index: {}]
  %s4 = inlined_call_operand.vmem [shape: f32[1,384], index: 4, kind: input, shape index: {}]
  %s5 = inlined_call_operand.hbm [shape: f32[128,256], index: 5, kind: input, shape index: {}]
  %s6 = inlined_call_operand.vmem [shape: f32[1,256], index: 6, kind: input, shape index: {}]
  %s7 = inlined_call_operand.hbm [shape: f32[256,256], index: 7, kind: input, shape index: {}]
  %s8 = inlined_call_operand.vmem [shape: f32[1,256], index: 8, kind: input, shape index: {}]
  %s9 = inlined_call_operand.hbm [shape: f32[256,128], index: 9, kind: input, shape index: {}]
  %s10 = inlined_call_operand.vmem [shape: f32[1,128], index: 10, kind: input, shape index: {}]
  %s11 = inlined_call_operand.hbm [shape: f32[256,128], index: 11, kind: input, shape index: {}]
  %s12 = inlined_call_operand.vmem [shape: f32[1,128], index: 12, kind: input, shape index: {}]
  %s13 = inlined_call_operand.hbm [shape: f32[32,128], index: 13, kind: output, shape index: {}]
  %s14 = sld [smem:[#allocation0]]
  $region90: #{tpu_custom_call.1} parent=0
    _
  %s16 = ssub.s32 1, %s14
  %s17 = scalar_select 0, %s16, %s14
  %18 = sst [smem:[#allocation2]] %s0
  $region1: #{tpu_custom_call.1} parent=0
    #allocation3 [shape = 'u8[32768]{0}', space=vmem, size = 0x8000, scoped, tag = 'input window, operand 1, single buffered']
    #allocation4 [shape = 's32[1]{0}', space=sflag, size = 0x4, scoped, tag = 'scoped memory for tpu_custom_call.1']
    #allocation5 [shape = 's32[1]{0}', space=sflag, size = 0x4, scoped, tag = 'scoped memory for tpu_custom_call.1']
    #allocation6 [shape = 'u8[32768]{0}', space=vmem, size = 0x8000, scoped, tag = 'input window, operand 2, single buffered']
    #allocation7 [shape = 's32[1]{0}', space=sflag, size = 0x4, scoped, tag = 'scoped memory for tpu_custom_call.1']
    #allocation8 [shape = 'u8[393216]{0}', space=vmem, size = 0x60000, scoped, tag = 'input window, operand 3, single buffered']
    #allocation9 [shape = 'u8[131072]{0}', space=vmem, size = 0x20000, scoped, tag = 'input window, operand 5, single buffered']
    #allocation10 [shape = 's32[1]{0}', space=sflag, size = 0x4, scoped, tag = 'scoped memory for tpu_custom_call.1']
    #allocation11 [shape = 'u8[262144]{0}', space=vmem, size = 0x40000, scoped, tag = 'input window, operand 7, single buffered']
    #allocation12 [shape = 'u8[131072]{0}', space=vmem, size = 0x20000, scoped, tag = 'input window, operand 9, single buffered']
    #allocation13 [shape = 's32[1]{0}', space=sflag, size = 0x4, scoped, tag = 'scoped memory for tpu_custom_call.1']
    #allocation14 [shape = 'u8[131072]{0}', space=vmem, size = 0x20000, scoped, tag = 'input window, operand 11, single buffered']
    #allocation15 [shape = 'u8[16384]{0}', space=vmem, size = 0x4000, scoped, tag = 'output window, operand 0, single buffered']
    %19 = vsyncpa [#allocation4], 0
    %20 = vsyncpa [#allocation7], 0
    %21 = vsyncpa [#allocation10], 0
    %22 = vsyncpa [#allocation13], 0
    %23 = vsyncpa [#allocation5], 0
    // Predicated region
    $region2: #{tpu_custom_call.1} parent=1 // pred_check
      _
    $region3: #{tpu_custom_call.1} parent=1 // pred_check_branch
      %25 = sbr.rel (0) target = $region5
    $region4: #{tpu_custom_call.1} parent=1 // pred_region
      _
    $region5: #{tpu_custom_call.1} parent=1 // pred_fallthru
      _
    // Predicated region
    $region6: #{tpu_custom_call.1} parent=1 // pred_check
      _
    $region7: #{tpu_custom_call.1} parent=1 // pred_check_branch
      %27 = sbr.rel (0) target = $region9
    $region8: #{tpu_custom_call.1} parent=1 // pred_region
      %s29 = ssub.s32 1024, 1024
      %30 = vsyncadd [#allocation4], %s29
      %s31 = sshll.u32 [#allocation3], 4
      %s32 = int_to_ptr.vmem [resolvable:$true] %s31
      %37 = dma.hbm_to_vmem [thread:$0]  %s1, 1024, %s32, [#allocation4], 256, 256, 16
    $region9: #{tpu_custom_call.1} parent=1 // pred_fallthru
      _
    // Predicated region
    $region10: #{tpu_custom_call.1} parent=1 // pred_check
      _
    $region11: #{tpu_custom_call.1} parent=1 // pred_check_branch
      %39 = sbr.rel (0) target = $region13
    $region12: #{tpu_custom_call.1} parent=1 // pred_region
      %s41 = ssub.s32 1024, 1024
      %42 = vsyncadd [#allocation7], %s41
      %s43 = sshll.u32 [#allocation6], 4
      %s44 = int_to_ptr.vmem [resolvable:$true] %s43
      %49 = dma.hbm_to_vmem [thread:$0]  %s2, 1024, %s44, [#allocation7], 256, 256, 16
    $region13: #{tpu_custom_call.1} parent=1 // pred_fallthru
      _
    // Predicated region
    $region14: #{tpu_custom_call.1} parent=1 // pred_check
      _
    $region15: #{tpu_custom_call.1} parent=1 // pred_check_branch
      %51 = sbr.rel (0) target = $region17
    $region16: #{tpu_custom_call.1} parent=1 // pred_region
      %s53 = ssub.s32 12288, 12288
      %54 = vsyncadd [#allocation7], %s53
      %s55 = sshll.u32 [#allocation8], 4
      %s56 = int_to_ptr.vmem [resolvable:$true] %s55
      %61 = dma.hbm_to_vmem [thread:$0]  %s3, 12288, %s56, [#allocation7], 384, 384, 24
    $region17: #{tpu_custom_call.1} parent=1 // pred_fallthru
      _
    // Predicated region
    $region18: #{tpu_custom_call.1} parent=1 // pred_check
      _
    $region19: #{tpu_custom_call.1} parent=1 // pred_check_branch
      %63 = sbr.rel (0) target = $region21
    $region20: #{tpu_custom_call.1} parent=1 // pred_region
      _
    $region21: #{tpu_custom_call.1} parent=1 // pred_fallthru
      _
    // Predicated region
    $region22: #{tpu_custom_call.1} parent=1 // pred_check
      _
    $region23: #{tpu_custom_call.1} parent=1 // pred_check_branch
      %65 = sbr.rel (0) target = $region25
    $region24: #{tpu_custom_call.1} parent=1 // pred_region
      %s67 = ssub.s32 4096, 4096
      %68 = vsyncadd [#allocation10], %s67
      %s69 = sshll.u32 [#allocation9], 4
      %s70 = int_to_ptr.vmem [resolvable:$true] %s69
      %75 = dma.hbm_to_vmem [thread:$0]  %s5, 4096, %s70, [#allocation10], 256, 256, 16
    $region25: #{tpu_custom_call.1} parent=1 // pred_fallthru
      _
    // Predicated region
    $region26: #{tpu_custom_call.1} parent=1 // pred_check
      _
    $region27: #{tpu_custom_call.1} parent=1 // pred_check_branch
      %77 = sbr.rel (0) target = $region29
    $region28: #{tpu_custom_call.1} parent=1 // pred_region
      _
    $region29: #{tpu_custom_call.1} parent=1 // pred_fallthru
      _
    // Predicated region
    $region30: #{tpu_custom_call.1} parent=1 // pred_check
      _
    $region31: #{tpu_custom_call.1} parent=1 // pred_check_branch
      %79 = sbr.rel (0) target = $region33
    $region32: #{tpu_custom_call.1} parent=1 // pred_region
      %s81 = ssub.s32 8192, 8192
      %82 = vsyncadd [#allocation10], %s81
      %s83 = sshll.u32 [#allocation11], 4
      %s84 = int_to_ptr.vmem [resolvable:$true] %s83
      %89 = dma.hbm_to_vmem [thread:$0]  %s7, 8192, %s84, [#allocation10], 256, 256, 16
    $region33: #{tpu_custom_call.1} parent=1 // pred_fallthru
      _
    // Predicated region
    $region34: #{tpu_custom_call.1} parent=1 // pred_check
      _
    $region35: #{tpu_custom_call.1} parent=1 // pred_check_branch
      %91 = sbr.rel (0) target = $region37
    $region36: #{tpu_custom_call.1} parent=1 // pred_region
      _
    $region37: #{tpu_custom_call.1} parent=1 // pred_fallthru
      _
    // Predicated region
    $region38: #{tpu_custom_call.1} parent=1 // pred_check
      _
    $region39: #{tpu_custom_call.1} parent=1 // pred_check_branch
      %93 = sbr.rel (0) target = $region41
    $region40: #{tpu_custom_call.1} parent=1 // pred_region
      %s95 = ssub.s32 4096, 4096
      %96 = vsyncadd [#allocation13], %s95
      %s97 = sshll.u32 [#allocation12], 4
      %s98 = int_to_ptr.vmem [resolvable:$true] %s97
      %103 = dma.hbm_to_vmem [thread:$0]  %s9, 4096, %s98, [#allocation13], 128, 128, 8
    $region41: #{tpu_custom_call.1} parent=1 // pred_fallthru
      _
    // Predicated region
    $region42: #{tpu_custom_call.1} parent=1 // pred_check
      _
    $region43: #{tpu_custom_call.1} parent=1 // pred_check_branch
      %105 = sbr.rel (0) target = $region45
    $region44: #{tpu_custom_call.1} parent=1 // pred_region
      _
    $region45: #{tpu_custom_call.1} parent=1 // pred_fallthru
      _
    // Predicated region
    $region46: #{tpu_custom_call.1} parent=1 // pred_check
      _
    $region47: #{tpu_custom_call.1} parent=1 // pred_check_branch
      %107 = sbr.rel (0) target = $region49
    $region48: #{tpu_custom_call.1} parent=1 // pred_region
      %s109 = ssub.s32 4096, 4096
      %110 = vsyncadd [#allocation13], %s109
      %s111 = sshll.u32 [#allocation14], 4
      %s112 = int_to_ptr.vmem [resolvable:$true] %s111
      %117 = dma.hbm_to_vmem [thread:$0]  %s11, 4096, %s112, [#allocation13], 128, 128, 8
    $region49: #{tpu_custom_call.1} parent=1 // pred_fallthru
      _
    // Predicated region
    $region50: #{tpu_custom_call.1} parent=1 // pred_check
      _
    $region51: #{tpu_custom_call.1} parent=1 // pred_check_branch
      %119 = sbr.rel (0) target = $region53
    $region52: #{tpu_custom_call.1} parent=1 // pred_region
      _
    $region53: #{tpu_custom_call.1} parent=1 // pred_fallthru
      _
    // Predicated region
    $region54: #{tpu_custom_call.1} parent=1 // pred_check
      _
    $region55: #{tpu_custom_call.1} parent=1 // pred_check_branch
      %121 = sbr.rel (0) target = $region57
    $region56: #{tpu_custom_call.1} parent=1 // pred_region
      %122 = dma.done [#allocation4], 1024
    $region57: #{tpu_custom_call.1} parent=1 // pred_fallthru
      _
    // Predicated region
    $region58: #{tpu_custom_call.1} parent=1 // pred_check
      _
    $region59: #{tpu_custom_call.1} parent=1 // pred_check_branch
      %124 = sbr.rel (0) target = $region61
    $region60: #{tpu_custom_call.1} parent=1 // pred_region
      %125 = dma.done [#allocation7], 1024
    $region61: #{tpu_custom_call.1} parent=1 // pred_fallthru
      _
    // Predicated region
    $region62: #{tpu_custom_call.1} parent=1 // pred_check
      _
    $region63: #{tpu_custom_call.1} parent=1 // pred_check_branch
      %127 = sbr.rel (0) target = $region65
    $region64: #{tpu_custom_call.1} parent=1 // pred_region
      %128 = dma.done [#allocation7], 12288
    $region65: #{tpu_custom_call.1} parent=1 // pred_fallthru
      _
    // Predicated region
    $region66: #{tpu_custom_call.1} parent=1 // pred_check
      _
    $region67: #{tpu_custom_call.1} parent=1 // pred_check_branch
      %130 = sbr.rel (0) target = $region69
    $region68: #{tpu_custom_call.1} parent=1 // pred_region
      %131 = dma.done [#allocation10], 4096
    $region69: #{tpu_custom_call.1} parent=1 // pred_fallthru
      _
    // Predicated region
    $region70: #{tpu_custom_call.1} parent=1 // pred_check
      _
    $region71: #{tpu_custom_call.1} parent=1 // pred_check_branch
      %133 = sbr.rel (0) target = $region73
    $region72: #{tpu_custom_call.1} parent=1 // pred_region
      %134 = dma.done [#allocation10], 8192
    $region73: #{tpu_custom_call.1} parent=1 // pred_fallthru
      _
    // Predicated region
    $region74: #{tpu_custom_call.1} parent=1 // pred_check
      _
    $region75: #{tpu_custom_call.1} parent=1 // pred_check_branch
      %136 = sbr.rel (0) target = $region77
    $region76: #{tpu_custom_call.1} parent=1 // pred_region
      %137 = dma.done [#allocation13], 4096
    $region77: #{tpu_custom_call.1} parent=1 // pred_fallthru
      _
    // Predicated region
    $region78: #{tpu_custom_call.1} parent=1 // pred_check
      _
    $region79: #{tpu_custom_call.1} parent=1 // pred_check_branch
      %139 = sbr.rel (0) target = $region81
    $region80: #{tpu_custom_call.1} parent=1 // pred_region
      %140 = dma.done [#allocation13], 4096
    $region81: #{tpu_custom_call.1} parent=1 // pred_fallthru
      _
    %v141 = vld [vmem:[#allocation3] sm:$0xff]
    %v142 = vld [vmem:[#allocation3 + $0x8] sm:$0xff]
    %v143 = vld [vmem:[#allocation3 + $0x10] sm:$0xff]
    %v144 = vld [vmem:[#allocation3 + $0x18] sm:$0xff]
    %v145 = vld [vmem:[#allocation3 + $0x20] sm:$0xff]
    %v146 = vld [vmem:[#allocation3 + $0x28] sm:$0xff]
    %v147 = vld [vmem:[#allocation3 + $0x30] sm:$0xff]
    %v148 = vld [vmem:[#allocation3 + $0x38] sm:$0xff]
    %v149 = vld [vmem:[#allocation6] sm:$0xff]
    %v150 = vld [vmem:[#allocation6 + $0x8] sm:$0xff]
    %v151 = vld [vmem:[#allocation6 + $0x10] sm:$0xff]
    %v152 = vld [vmem:[#allocation6 + $0x18] sm:$0xff]
    %v153 = vld [vmem:[#allocation6 + $0x20] sm:$0xff]
    %v154 = vld [vmem:[#allocation6 + $0x28] sm:$0xff]
    %v155 = vld [vmem:[#allocation6 + $0x30] sm:$0xff]
    %v156 = vld [vmem:[#allocation6 + $0x38] sm:$0xff]
    %v157 = vld [vmem:[#allocation8] sm:$0xff]
    %v158 = vld [vmem:[#allocation8 + $0x8] sm:$0xff]
    %v159 = vld [vmem:[#allocation8 + $0x10] sm:$0xff]
    %v160 = vld [vmem:[#allocation8 + $0x18] sm:$0xff]
    %v161 = vld [vmem:[#allocation8 + $0x20] sm:$0xff]
    %v162 = vld [vmem:[#allocation8 + $0x28] sm:$0xff]
    %v163 = vld [vmem:[#allocation8 + $0x30] sm:$0xff]
    %v164 = vld [vmem:[#allocation8 + $0x38] sm:$0xff]
    %v165 = vld [vmem:[#allocation8 + $0x40] sm:$0xff]
    %v166 = vld [vmem:[#allocation8 + $0x48] sm:$0xff]
    %v167 = vld [vmem:[#allocation8 + $0x50] sm:$0xff]
    %v168 = vld [vmem:[#allocation8 + $0x58] sm:$0xff]
    %v169 = vld [vmem:[#allocation8 + $0x60] sm:$0xff]
    %v170 = vld [vmem:[#allocation8 + $0x68] sm:$0xff]
    %v171 = vld [vmem:[#allocation8 + $0x70] sm:$0xff]
    %v172 = vld [vmem:[#allocation8 + $0x78] sm:$0xff]
    %v173 = vld [vmem:[#allocation8 + $0x80] sm:$0xff]
    %v174 = vld [vmem:[#allocation8 + $0x88] sm:$0xff]
    %v175 = vld [vmem:[#allocation8 + $0x90] sm:$0xff]
    %v176 = vld [vmem:[#allocation8 + $0x98] sm:$0xff]
    %v177 = vld [vmem:[#allocation8 + $0xa0] sm:$0xff]
    %v178 = vld [vmem:[#allocation8 + $0xa8] sm:$0xff]
    %v179 = vld [vmem:[#allocation8 + $0xb0] sm:$0xff]
    %v180 = vld [vmem:[#allocation8 + $0xb8] sm:$0xff]
    %v181 = vld [vmem:[#allocation8 + $0xc0] sm:$0xff]
    %v182 = vld [vmem:[#allocation8 + $0xc8] sm:$0xff]
    %v183 = vld [vmem:[#allocation8 + $0xd0] sm:$0xff]
    %v184 = vld [vmem:[#allocation8 + $0xd8] sm:$0xff]
    %v185 = vld [vmem:[#allocation8 + $0xe0] sm:$0xff]
    %v186 = vld [vmem:[#allocation8 + $0xe8] sm:$0xff]
    %v187 = vld [vmem:[#allocation8 + $0xf0] sm:$0xff]
    %v188 = vld [vmem:[#allocation8 + $0xf8] sm:$0xff]
    %v189 = vld [vmem:[#allocation8 + $0x100] sm:$0xff]
    %v190 = vld [vmem:[#allocation8 + $0x108] sm:$0xff]
    %v191 = vld [vmem:[#allocation8 + $0x110] sm:$0xff]
    %v192 = vld [vmem:[#allocation8 + $0x118] sm:$0xff]
    %v193 = vld [vmem:[#allocation8 + $0x120] sm:$0xff]
    %v194 = vld [vmem:[#allocation8 + $0x128] sm:$0xff]
    %v195 = vld [vmem:[#allocation8 + $0x130] sm:$0xff]
    %v196 = vld [vmem:[#allocation8 + $0x138] sm:$0xff]
    %v197 = vld [vmem:[#allocation8 + $0x140] sm:$0xff]
    %v198 = vld [vmem:[#allocation8 + $0x148] sm:$0xff]
    %v199 = vld [vmem:[#allocation8 + $0x150] sm:$0xff]
    %v200 = vld [vmem:[#allocation8 + $0x158] sm:$0xff]
    %v201 = vld [vmem:[#allocation8 + $0x160] sm:$0xff]
    %v202 = vld [vmem:[#allocation8 + $0x168] sm:$0xff]
    %v203 = vld [vmem:[#allocation8 + $0x170] sm:$0xff]
    %v204 = vld [vmem:[#allocation8 + $0x178] sm:$0xff]
    %v205 = vld [vmem:[#allocation8 + $0x180] sm:$0xff]
    %v206 = vld [vmem:[#allocation8 + $0x188] sm:$0xff]
    %v207 = vld [vmem:[#allocation8 + $0x190] sm:$0xff]
    %v208 = vld [vmem:[#allocation8 + $0x198] sm:$0xff]
    %v209 = vld [vmem:[#allocation8 + $0x1a0] sm:$0xff]
    %v210 = vld [vmem:[#allocation8 + $0x1a8] sm:$0xff]
    %v211 = vld [vmem:[#allocation8 + $0x1b0] sm:$0xff]
    %v212 = vld [vmem:[#allocation8 + $0x1b8] sm:$0xff]
    %v213 = vld [vmem:[#allocation8 + $0x1c0] sm:$0xff]
    %v214 = vld [vmem:[#allocation8 + $0x1c8] sm:$0xff]
    %v215 = vld [vmem:[#allocation8 + $0x1d0] sm:$0xff]
    %v216 = vld [vmem:[#allocation8 + $0x1d8] sm:$0xff]
    %v217 = vld [vmem:[#allocation8 + $0x1e0] sm:$0xff]
    %v218 = vld [vmem:[#allocation8 + $0x1e8] sm:$0xff]
    %v219 = vld [vmem:[#allocation8 + $0x1f0] sm:$0xff]
    %v220 = vld [vmem:[#allocation8 + $0x1f8] sm:$0xff]
    %v221 = vld [vmem:[#allocation8 + $0x200] sm:$0xff]
    %v222 = vld [vmem:[#allocation8 + $0x208] sm:$0xff]
    %v223 = vld [vmem:[#allocation8 + $0x210] sm:$0xff]
    %v224 = vld [vmem:[#allocation8 + $0x218] sm:$0xff]
    %v225 = vld [vmem:[#allocation8 + $0x220] sm:$0xff]
    %v226 = vld [vmem:[#allocation8 + $0x228] sm:$0xff]
    %v227 = vld [vmem:[#allocation8 + $0x230] sm:$0xff]
    %v228 = vld [vmem:[#allocation8 + $0x238] sm:$0xff]
    %v229 = vld [vmem:[#allocation8 + $0x240] sm:$0xff]
    %v230 = vld [vmem:[#allocation8 + $0x248] sm:$0xff]
    %v231 = vld [vmem:[#allocation8 + $0x250] sm:$0xff]
    %v232 = vld [vmem:[#allocation8 + $0x258] sm:$0xff]
    %v233 = vld [vmem:[#allocation8 + $0x260] sm:$0xff]
    %v234 = vld [vmem:[#allocation8 + $0x268] sm:$0xff]
    %v235 = vld [vmem:[#allocation8 + $0x270] sm:$0xff]
    %v236 = vld [vmem:[#allocation8 + $0x278] sm:$0xff]
    %v237 = vld [vmem:[#allocation8 + $0x280] sm:$0xff]
    %v238 = vld [vmem:[#allocation8 + $0x288] sm:$0xff]
    %v239 = vld [vmem:[#allocation8 + $0x290] sm:$0xff]
    %v240 = vld [vmem:[#allocation8 + $0x298] sm:$0xff]
    %v241 = vld [vmem:[#allocation8 + $0x2a0] sm:$0xff]
    %v242 = vld [vmem:[#allocation8 + $0x2a8] sm:$0xff]
    %v243 = vld [vmem:[#allocation8 + $0x2b0] sm:$0xff]
    %v244 = vld [vmem:[#allocation8 + $0x2b8] sm:$0xff]
    %v245 = vld [vmem:[#allocation8 + $0x2c0] sm:$0xff]
    %v246 = vld [vmem:[#allocation8 + $0x2c8] sm:$0xff]
    %v247 = vld [vmem:[#allocation8 + $0x2d0] sm:$0xff]
    %v248 = vld [vmem:[#allocation8 + $0x2d8] sm:$0xff]
    %v249 = vld [vmem:[#allocation8 + $0x2e0] sm:$0xff]
    %v250 = vld [vmem:[#allocation8 + $0x2e8] sm:$0xff]
    %v251 = vld [vmem:[#allocation8 + $0x2f0] sm:$0xff]
    %v252 = vld [vmem:[#allocation8 + $0x2f8] sm:$0xff]
    %v253 = vld [vmem:[%s4] sm:$0x7]
    %v255 = vlaneseq
    %v256 = vshrl.u32 %v255, 7
    %v257 = vsub.s32 0, %v256
    %v258 = vrot.slane %v253, %v257
    %v259 = vlaneseq
    %v260 = vshrl.u32 %v259, 7
    %v261 = vsub.s32 1, %v260
    %v262 = vrot.slane %v253, %v261
    %v263 = vlaneseq
    %v264 = vshrl.u32 %v263, 7
    %v265 = vsub.s32 2, %v264
    %v266 = vrot.slane %v253, %v265
    %270 = vmatprep.subr.mxu0 %v158
    %271 = vmatpush1.msra.mxu0 %v157
    %272 = vmatprep.subr.mxu0 %v161
    %273 = vmatpush1.msra.mxu0 %v160
    %274 = vmatprep.subr.mxu0 %v164
    %275 = vmatpush1.msra.mxu0 %v163
    %276 = vmatprep.subr.mxu0 %v167
    %277 = vmatpush1.msra.mxu0 %v166
    %278 = vmatprep.subr.mxu0 %v170
    %279 = vmatpush1.msra.mxu0 %v169
    %280 = vmatprep.subr.mxu0 %v173
    %281 = vmatpush1.msra.mxu0 %v172
    %282 = vmatprep.subr.mxu0 %v176
    %283 = vmatpush1.msra.mxu0 %v175
    %284 = vmatprep.subr.mxu0 %v179
    %285 = vmatpush1.msra.mxu0 %v178
    %286 = vmatprep.subr.mxu0 %v182
    %287 = vmatpush1.msra.mxu0 %v181
    %288 = vmatprep.subr.mxu0 %v185
    %289 = vmatpush1.msra.mxu0 %v184
    %290 = vmatprep.subr.mxu0 %v188
    %291 = vmatpush1.msra.mxu0 %v187
    %292 = vmatprep.subr.mxu0 %v191
    %293 = vmatpush1.msra.mxu0 %v190
    %294 = vmatprep.subr.mxu0 %v194
    %295 = vmatpush1.msra.mxu0 %v193
    %296 = vmatprep.subr.mxu0 %v197
    %297 = vmatpush1.msra.mxu0 %v196
    %298 = vmatprep.subr.mxu0 %v200
    %299 = vmatpush1.msra.mxu0 %v199
    %300 = vmatprep.subr.mxu0 %v203
    %301 = vmatpush1.msra.mxu0 %v202
    %302 = vmatprep.subr.mxu0 %v206
    %303 = vmatpush1.msra.mxu0 %v205
    %304 = vmatprep.subr.mxu0 %v209
    %305 = vmatpush1.msra.mxu0 %v208
    %306 = vmatprep.subr.mxu0 %v212
    %307 = vmatpush1.msra.mxu0 %v211
    %308 = vmatprep.subr.mxu0 %v215
    %309 = vmatpush1.msra.mxu0 %v214
    %310 = vmatprep.subr.mxu0 %v218
    %311 = vmatpush1.msra.mxu0 %v217
    %312 = vmatprep.subr.mxu0 %v221
    %313 = vmatpush1.msra.mxu0 %v220
    %314 = vmatprep.subr.mxu0 %v224
    %315 = vmatpush1.msra.mxu0 %v223
    %316 = vmatprep.subr.mxu0 %v227
    %317 = vmatpush1.msra.mxu0 %v226
    %318 = vmatprep.subr.mxu0 %v230
    %319 = vmatpush1.msra.mxu0 %v229
    %320 = vmatprep.subr.mxu0 %v233
    %321 = vmatpush1.msra.mxu0 %v232
    %322 = vmatprep.subr.mxu0 %v236
    %323 = vmatpush1.msra.mxu0 %v235
    %324 = vmatprep.subr.mxu0 %v239
    %325 = vmatpush1.msra.mxu0 %v238
    %326 = vmatprep.subr.mxu0 %v242
    %327 = vmatpush1.msra.mxu0 %v241
    %328 = vmatprep.subr.mxu0 %v245
    %329 = vmatpush1.msra.mxu0 %v244
    %330 = vmatprep.subr.mxu0 %v248
    %331 = vmatpush1.msra.mxu0 %v247
    %332 = vmatprep.subr.mxu0 %v251
    %333 = vmatpush1.msra.mxu0 %v250
    %334 = vmatprep.mubr.f32.mxu0 %v142
    %335 = vmatmul.mubr.f32.gmra.mrb[0].mxu0 %v141
    %v336 = vpop.f32.mrb[0].mxu0
    %v337 = vadd.f32 %v258, %v336
    %v338 = vpop.f32.mrb[0].mxu0
    %v339 = vadd.f32 %v262, %v338
    %340 = vmatprep.mubr.f32.mxu0 %v144
    %341 = vmatmul.mubr.f32.gmra.mrb[0].mxu0 %v143
    %v342 = vpop.f32.mrb[0].mxu0
    %v343 = vadd.f32 %v258, %v342
    %v344 = vpop.f32.mrb[0].mxu0
    %v345 = vadd.f32 %v262, %v344
    %346 = vmatprep.mubr.f32.mxu0 %v146
    %347 = vmatmul.mubr.f32.gmra.mrb[0].mxu0 %v145
    %v348 = vpop.f32.mrb[0].mxu0
    %v349 = vadd.f32 %v258, %v348
    %v350 = vpop.f32.mrb[0].mxu0
    %v351 = vadd.f32 %v262, %v350
    %352 = vmatprep.mubr.f32.mxu0 %v148
    %353 = vmatmul.mubr.f32.gmra.mrb[0].mxu0 %v147
    %v354 = vpop.f32.mrb[0].mxu0
    %v355 = vadd.f32 %v258, %v354
    %v356 = vpop.f32.mrb[0].mxu0
    %v357 = vadd.f32 %v262, %v356
    %358 = vdwg.mxu0
    %359 = vmatprep.subr.mxu0 0.0
    %360 = vmatpush1.msra.mxu0 %v159
    %361 = vmatprep.subr.mxu0 0.0
    %362 = vmatpush1.msra.mxu0 %v162
    %363 = vmatprep.subr.mxu0 0.0
    %364 = vmatpush1.msra.mxu0 %v165
    %365 = vmatprep.subr.mxu0 0.0
    %366 = vmatpush1.msra.mxu0 %v168
    %367 = vmatprep.subr.mxu0 0.0
    %368 = vmatpush1.msra.mxu0 %v171
    %369 = vmatprep.subr.mxu0 0.0
    %370 = vmatpush1.msra.mxu0 %v174
    %371 = vmatprep.subr.mxu0 0.0
    %372 = vmatpush1.msra.mxu0 %v177
    %373 = vmatprep.subr.mxu0 0.0
    %374 = vmatpush1.msra.mxu0 %v180
    %375 = vmatprep.subr.mxu0 0.0
    %376 = vmatpush1.msra.mxu0 %v183
    %377 = vmatprep.subr.mxu0 0.0
    %378 = vmatpush1.msra.mxu0 %v186
    %379 = vmatprep.subr.mxu0 0.0
    %380 = vmatpush1.msra.mxu0 %v189
    %381 = vmatprep.subr.mxu0 0.0
    %382 = vmatpush1.msra.mxu0 %v192
    %383 = vmatprep.subr.mxu0 0.0
    %384 = vmatpush1.msra.mxu0 %v195
    %385 = vmatprep.subr.mxu0 0.0
    %386 = vmatpush1.msra.mxu0 %v198
    %387 = vmatprep.subr.mxu0 0.0
    %388 = vmatpush1.msra.mxu0 %v201
    %389 = vmatprep.subr.mxu0 0.0
    %390 = vmatpush1.msra.mxu0 %v204
    %391 = vmatprep.subr.mxu0 0.0
    %392 = vmatpush1.msra.mxu0 %v207
    %393 = vmatprep.subr.mxu0 0.0
    %394 = vmatpush1.msra.mxu0 %v210
    %395 = vmatprep.subr.mxu0 0.0
    %396 = vmatpush1.msra.mxu0 %v213
    %397 = vmatprep.subr.mxu0 0.0
    %398 = vmatpush1.msra.mxu0 %v216
    %399 = vmatprep.subr.mxu0 0.0
    %400 = vmatpush1.msra.mxu0 %v219
    %401 = vmatprep.subr.mxu0 0.0
    %402 = vmatpush1.msra.mxu0 %v222
    %403 = vmatprep.subr.mxu0 0.0
    %404 = vmatpush1.msra.mxu0 %v225
    %405 = vmatprep.subr.mxu0 0.0
    %406 = vmatpush1.msra.mxu0 %v228
    %407 = vmatprep.subr.mxu0 0.0
    %408 = vmatpush1.msra.mxu0 %v231
    %409 = vmatprep.subr.mxu0 0.0
    %410 = vmatpush1.msra.mxu0 %v234
    %411 = vmatprep.subr.mxu0 0.0
    %412 = vmatpush1.msra.mxu0 %v237
    %413 = vmatprep.subr.mxu0 0.0
    %414 = vmatpush1.msra.mxu0 %v240
    %415 = vmatprep.subr.mxu0 0.0
    %416 = vmatpush1.msra.mxu0 %v243
    %417 = vmatprep.subr.mxu0 0.0
    %418 = vmatpush1.msra.mxu0 %v246
    %419 = vmatprep.subr.mxu0 0.0
    %420 = vmatpush1.msra.mxu0 %v249
    %421 = vmatprep.subr.mxu0 0.0
    %422 = vmatpush1.msra.mxu0 %v252
    %423 = vmatprep.mubr.f32.mxu0 %v142
    %424 = vmatmul.mubr.f32.gmra.mrb[0].mxu0 %v141
    %v425 = vpop.f32.mrb[0].mxu0
    %v426 = vadd.f32 %v266, %v425
    %v427 = vpop.f32.mrb[0].mxu0
    %428 = vmatprep.mubr.f32.mxu0 %v144
    %429 = vmatmul.mubr.f32.gmra.mrb[0].mxu0 %v143
    %v430 = vpop.f32.mrb[0].mxu0
    %v431 = vadd.f32 %v266, %v430
    %v432 = vpop.f32.mrb[0].mxu0
    %433 = vmatprep.mubr.f32.mxu0 %v146
    %434 = vmatmul.mubr.f32.gmra.mrb[0].mxu0 %v145
    %v435 = vpop.f32.mrb[0].mxu0
    %v436 = vadd.f32 %v266, %v435
    %v437 = vpop.f32.mrb[0].mxu0
    %438 = vmatprep.mubr.f32.mxu0 %v148
    %439 = vmatmul.mubr.f32.gmra.mrb[0].mxu0 %v147
    %v440 = vpop.f32.mrb[0].mxu0
    %v441 = vadd.f32 %v266, %v440
    %v442 = vpop.f32.mrb[0].mxu0
    %443 = vdwg.mxu0
    %v444 = vmax.f32 %v337, 0.0
    %v445 = vmax.f32 %v339, 0.0
    %v446 = vmax.f32 %v426, 0.0
    %v447 = vmax.f32 %v343, 0.0
    %v448 = vmax.f32 %v345, 0.0
    %v449 = vmax.f32 %v431, 0.0
    %v450 = vmax.f32 %v349, 0.0
    %v451 = vmax.f32 %v351, 0.0
    %v452 = vmax.f32 %v436, 0.0
    %v453 = vmax.f32 %v355, 0.0
    %v454 = vmax.f32 %v357, 0.0
    %v455 = vmax.f32 %v441, 0.0
    %v456 = vld [vmem:[#allocation9] sm:$0xff]
    %v457 = vld [vmem:[#allocation9 + $0x8] sm:$0xff]
    %v458 = vld [vmem:[#allocation9 + $0x10] sm:$0xff]
    %v459 = vld [vmem:[#allocation9 + $0x18] sm:$0xff]
    %v460 = vld [vmem:[#allocation9 + $0x20] sm:$0xff]
    %v461 = vld [vmem:[#allocation9 + $0x28] sm:$0xff]
    %v462 = vld [vmem:[#allocation9 + $0x30] sm:$0xff]
    %v463 = vld [vmem:[#allocation9 + $0x38] sm:$0xff]
    %v464 = vld [vmem:[#allocation9 + $0x40] sm:$0xff]
    %v465 = vld [vmem:[#allocation9 + $0x48] sm:$0xff]
    %v466 = vld [vmem:[#allocation9 + $0x50] sm:$0xff]
    %v467 = vld [vmem:[#allocation9 + $0x58] sm:$0xff]
    %v468 = vld [vmem:[#allocation9 + $0x60] sm:$0xff]
    %v469 = vld [vmem:[#allocation9 + $0x68] sm:$0xff]
    %v470 = vld [vmem:[#allocation9 + $0x70] sm:$0xff]
    %v471 = vld [vmem:[#allocation9 + $0x78] sm:$0xff]
    %v472 = vld [vmem:[#allocation9 + $0x80] sm:$0xff]
    %v473 = vld [vmem:[#allocation9 + $0x88] sm:$0xff]
    %v474 = vld [vmem:[#allocation9 + $0x90] sm:$0xff]
    %v475 = vld [vmem:[#allocation9 + $0x98] sm:$0xff]
    %v476 = vld [vmem:[#allocation9 + $0xa0] sm:$0xff]
    %v477 = vld [vmem:[#allocation9 + $0xa8] sm:$0xff]
    %v478 = vld [vmem:[#allocation9 + $0xb0] sm:$0xff]
    %v479 = vld [vmem:[#allocation9 + $0xb8] sm:$0xff]
    %v480 = vld [vmem:[#allocation9 + $0xc0] sm:$0xff]
    %v481 = vld [vmem:[#allocation9 + $0xc8] sm:$0xff]
    %v482 = vld [vmem:[#allocation9 + $0xd0] sm:$0xff]
    %v483 = vld [vmem:[#allocation9 + $0xd8] sm:$0xff]
    %v484 = vld [vmem:[#allocation9 + $0xe0] sm:$0xff]
    %v485 = vld [vmem:[#allocation9 + $0xe8] sm:$0xff]
    %v486 = vld [vmem:[#allocation9 + $0xf0] sm:$0xff]
    %v487 = vld [vmem:[#allocation9 + $0xf8] sm:$0xff]
    %v488 = vld [vmem:[%s6] sm:$0x3]
    %v490 = vlaneseq
    %v491 = vshrl.u32 %v490, 7
    %v492 = vsub.s32 0, %v491
    %v493 = vrot.slane %v488, %v492
    %v494 = vlaneseq
    %v495 = vshrl.u32 %v494, 7
    %v496 = vsub.s32 1, %v495
    %v497 = vrot.slane %v488, %v496
    %500 = vmatprep.subr.mxu0 %v457
    %501 = vmatpush1.msra.mxu0 %v456
    %502 = vmatprep.subr.mxu0 %v459
    %503 = vmatpush1.msra.mxu0 %v458
    %504 = vmatprep.subr.mxu0 %v461
    %505 = vmatpush1.msra.mxu0 %v460
    %506 = vmatprep.subr.mxu0 %v463
    %507 = vmatpush1.msra.mxu0 %v462
    %508 = vmatprep.subr.mxu0 %v465
    %509 = vmatpush1.msra.mxu0 %v464
    %510 = vmatprep.subr.mxu0 %v467
    %511 = vmatpush1.msra.mxu0 %v466
    %512 = vmatprep.subr.mxu0 %v469
    %513 = vmatpush1.msra.mxu0 %v468
    %514 = vmatprep.subr.mxu0 %v471
    %515 = vmatpush1.msra.mxu0 %v470
    %516 = vmatprep.subr.mxu0 %v473
    %517 = vmatpush1.msra.mxu0 %v472
    %518 = vmatprep.subr.mxu0 %v475
    %519 = vmatpush1.msra.mxu0 %v474
    %520 = vmatprep.subr.mxu0 %v477
    %521 = vmatpush1.msra.mxu0 %v476
    %522 = vmatprep.subr.mxu0 %v479
    %523 = vmatpush1.msra.mxu0 %v478
    %524 = vmatprep.subr.mxu0 %v481
    %525 = vmatpush1.msra.mxu0 %v480
    %526 = vmatprep.subr.mxu0 %v483
    %527 = vmatpush1.msra.mxu0 %v482
    %528 = vmatprep.subr.mxu0 %v485
    %529 = vmatpush1.msra.mxu0 %v484
    %530 = vmatprep.subr.mxu0 %v487
    %531 = vmatpush1.msra.mxu0 %v486
    %532 = vmatprep.subr.mxu0 0.0
    %533 = vmatpush1.msra.mxu0 0.0
    %534 = vmatprep.subr.mxu0 0.0
    %535 = vmatpush1.msra.mxu0 0.0
    %536 = vmatprep.subr.mxu0 0.0
    %537 = vmatpush1.msra.mxu0 0.0
    %538 = vmatprep.subr.mxu0 0.0
    %539 = vmatpush1.msra.mxu0 0.0
    %540 = vmatprep.subr.mxu0 0.0
    %541 = vmatpush1.msra.mxu0 0.0
    %542 = vmatprep.subr.mxu0 0.0
    %543 = vmatpush1.msra.mxu0 0.0
    %544 = vmatprep.subr.mxu0 0.0
    %545 = vmatpush1.msra.mxu0 0.0
    %546 = vmatprep.subr.mxu0 0.0
    %547 = vmatpush1.msra.mxu0 0.0
    %548 = vmatprep.subr.mxu0 0.0
    %549 = vmatpush1.msra.mxu0 0.0
    %550 = vmatprep.subr.mxu0 0.0
    %551 = vmatpush1.msra.mxu0 0.0
    %552 = vmatprep.subr.mxu0 0.0
    %553 = vmatpush1.msra.mxu0 0.0
    %554 = vmatprep.subr.mxu0 0.0
    %555 = vmatpush1.msra.mxu0 0.0
    %556 = vmatprep.subr.mxu0 0.0
    %557 = vmatpush1.msra.mxu0 0.0
    %558 = vmatprep.subr.mxu0 0.0
    %559 = vmatpush1.msra.mxu0 0.0
    %560 = vmatprep.subr.mxu0 0.0
    %561 = vmatpush1.msra.mxu0 0.0
    %562 = vmatprep.subr.mxu0 0.0
    %563 = vmatpush1.msra.mxu0 0.0
    %564 = vmatprep.mubr.f32.mxu0 0.0
    %565 = vmatmul.mubr.f32.gmra.mrb[0].mxu0 %v444
    %v566 = vpop.f32.mrb[0].mxu0
    %v567 = vadd.f32 %v493, %v566
    %v568 = vpop.f32.mrb[0].mxu0
    %v569 = vadd.f32 %v497, %v568
    %570 = vmatprep.mubr.f32.mxu0 0.0
    %571 = vmatmul.mubr.f32.gmra.mrb[0].mxu0 %v447
    %v572 = vpop.f32.mrb[0].mxu0
    %v573 = vadd.f32 %v493, %v572
    %v574 = vpop.f32.mrb[0].mxu0
    %v575 = vadd.f32 %v497, %v574
    %576 = vmatprep.mubr.f32.mxu0 0.0
    %577 = vmatmul.mubr.f32.gmra.mrb[0].mxu0 %v450
    %v578 = vpop.f32.mrb[0].mxu0
    %v579 = vadd.f32 %v493, %v578
    %v580 = vpop.f32.mrb[0].mxu0
    %v581 = vadd.f32 %v497, %v580
    %582 = vmatprep.mubr.f32.mxu0 0.0
    %583 = vmatmul.mubr.f32.gmra.mrb[0].mxu0 %v453
    %v584 = vpop.f32.mrb[0].mxu0
    %v585 = vadd.f32 %v493, %v584
    %v586 = vpop.f32.mrb[0].mxu0
    %v587 = vadd.f32 %v497, %v586
    %588 = vdwg.mxu0
    %v589 = vxor.u32 %v567, 2147483648
    %v590 = vxor.u32 %v569, 2147483648
    %v591 = vxor.u32 %v573, 2147483648
    %v592 = vxor.u32 %v575, 2147483648
    %v593 = vxor.u32 %v579, 2147483648
    %v594 = vxor.u32 %v581, 2147483648
    %v595 = vxor.u32 %v585, 2147483648
    %v596 = vxor.u32 %v587, 2147483648
    %v597 = vmul.f32 %v589, 1.442695
    %v598 = vpow.pop %v597
    %v599 = vmul.f32 %v590, 1.442695
    %v600 = vpow.pop %v599
    %v601 = vmul.f32 %v591, 1.442695
    %v602 = vpow.pop %v601
    %v603 = vmul.f32 %v592, 1.442695
    %v604 = vpow.pop %v603
    %v605 = vmul.f32 %v593, 1.442695
    %v606 = vpow.pop %v605
    %v607 = vmul.f32 %v594, 1.442695
    %v608 = vpow.pop %v607
    %v609 = vmul.f32 %v595, 1.442695
    %v610 = vpow.pop %v609
    %v611 = vmul.f32 %v596, 1.442695
    %v612 = vpow.pop %v611
    %v613 = vadd.f32 %v598, 1.0
    %v614 = vadd.f32 %v600, 1.0
    %v615 = vadd.f32 %v602, 1.0
    %v616 = vadd.f32 %v604, 1.0
    %v617 = vadd.f32 %v606, 1.0
    %v618 = vadd.f32 %v608, 1.0
    %v619 = vadd.f32 %v610, 1.0
    %v620 = vadd.f32 %v612, 1.0
    %v621 = vrcp.pop %v613
    %v622 = vmul.f32 1.0, %v621
    %v623 = vrcp.pop %v614
    %v624 = vmul.f32 1.0, %v623
    %v625 = vrcp.pop %v615
    %v626 = vmul.f32 1.0, %v625
    %v627 = vrcp.pop %v616
    %v628 = vmul.f32 1.0, %v627
    %v629 = vrcp.pop %v617
    %v630 = vmul.f32 1.0, %v629
    %v631 = vrcp.pop %v618
    %v632 = vmul.f32 1.0, %v631
    %v633 = vrcp.pop %v619
    %v634 = vmul.f32 1.0, %v633
    %v635 = vrcp.pop %v620
    %v636 = vmul.f32 1.0, %v635
    %v637 = vmul.f32 %v622, %v149
    %v638 = vmul.f32 %v624, %v150
    %v639 = vmul.f32 %v626, %v151
    %v640 = vmul.f32 %v628, %v152
    %v641 = vmul.f32 %v630, %v153
    %v642 = vmul.f32 %v632, %v154
    %v643 = vmul.f32 %v634, %v155
    %v644 = vmul.f32 %v636, %v156
    %v645 = vadd.f32 %v141, %v637
    %v646 = vadd.f32 %v142, %v638
    %v647 = vadd.f32 %v143, %v639
    %v648 = vadd.f32 %v144, %v640
    %v649 = vadd.f32 %v145, %v641
    %v650 = vadd.f32 %v146, %v642
    %v651 = vadd.f32 %v147, %v643
    %v652 = vadd.f32 %v148, %v644
    %v653 = vld [vmem:[#allocation11] sm:$0xff]
    %v654 = vld [vmem:[#allocation11 + $0x8] sm:$0xff]
    %v655 = vld [vmem:[#allocation11 + $0x10] sm:$0xff]
    %v656 = vld [vmem:[#allocation11 + $0x18] sm:$0xff]
    %v657 = vld [vmem:[#allocation11 + $0x20] sm:$0xff]
    %v658 = vld [vmem:[#allocation11 + $0x28] sm:$0xff]
    %v659 = vld [vmem:[#allocation11 + $0x30] sm:$0xff]
    %v660 = vld [vmem:[#allocation11 + $0x38] sm:$0xff]
    %v661 = vld [vmem:[#allocation11 + $0x40] sm:$0xff]
    %v662 = vld [vmem:[#allocation11 + $0x48] sm:$0xff]
    %v663 = vld [vmem:[#allocation11 + $0x50] sm:$0xff]
    %v664 = vld [vmem:[#allocation11 + $0x58] sm:$0xff]
    %v665 = vld [vmem:[#allocation11 + $0x60] sm:$0xff]
    %v666 = vld [vmem:[#allocation11 + $0x68] sm:$0xff]
    %v667 = vld [vmem:[#allocation11 + $0x70] sm:$0xff]
    %v668 = vld [vmem:[#allocation11 + $0x78] sm:$0xff]
    %v669 = vld [vmem:[#allocation11 + $0x80] sm:$0xff]
    %v670 = vld [vmem:[#allocation11 + $0x88] sm:$0xff]
    %v671 = vld [vmem:[#allocation11 + $0x90] sm:$0xff]
    %v672 = vld [vmem:[#allocation11 + $0x98] sm:$0xff]
    %v673 = vld [vmem:[#allocation11 + $0xa0] sm:$0xff]
    %v674 = vld [vmem:[#allocation11 + $0xa8] sm:$0xff]
    %v675 = vld [vmem:[#allocation11 + $0xb0] sm:$0xff]
    %v676 = vld [vmem:[#allocation11 + $0xb8] sm:$0xff]
    %v677 = vld [vmem:[#allocation11 + $0xc0] sm:$0xff]
    %v678 = vld [vmem:[#allocation11 + $0xc8] sm:$0xff]
    %v679 = vld [vmem:[#allocation11 + $0xd0] sm:$0xff]
    %v680 = vld [vmem:[#allocation11 + $0xd8] sm:$0xff]
    %v681 = vld [vmem:[#allocation11 + $0xe0] sm:$0xff]
    %v682 = vld [vmem:[#allocation11 + $0xe8] sm:$0xff]
    %v683 = vld [vmem:[#allocation11 + $0xf0] sm:$0xff]
    %v684 = vld [vmem:[#allocation11 + $0xf8] sm:$0xff]
    %v685 = vld [vmem:[#allocation11 + $0x100] sm:$0xff]
    %v686 = vld [vmem:[#allocation11 + $0x108] sm:$0xff]
    %v687 = vld [vmem:[#allocation11 + $0x110] sm:$0xff]
    %v688 = vld [vmem:[#allocation11 + $0x118] sm:$0xff]
    %v689 = vld [vmem:[#allocation11 + $0x120] sm:$0xff]
    %v690 = vld [vmem:[#allocation11 + $0x128] sm:$0xff]
    %v691 = vld [vmem:[#allocation11 + $0x130] sm:$0xff]
    %v692 = vld [vmem:[#allocation11 + $0x138] sm:$0xff]
    %v693 = vld [vmem:[#allocation11 + $0x140] sm:$0xff]
    %v694 = vld [vmem:[#allocation11 + $0x148] sm:$0xff]
    %v695 = vld [vmem:[#allocation11 + $0x150] sm:$0xff]
    %v696 = vld [vmem:[#allocation11 + $0x158] sm:$0xff]
    %v697 = vld [vmem:[#allocation11 + $0x160] sm:$0xff]
    %v698 = vld [vmem:[#allocation11 + $0x168] sm:$0xff]
    %v699 = vld [vmem:[#allocation11 + $0x170] sm:$0xff]
    %v700 = vld [vmem:[#allocation11 + $0x178] sm:$0xff]
    %v701 = vld [vmem:[#allocation11 + $0x180] sm:$0xff]
    %v702 = vld [vmem:[#allocation11 + $0x188] sm:$0xff]
    %v703 = vld [vmem:[#allocation11 + $0x190] sm:$0xff]
    %v704 = vld [vmem:[#allocation11 + $0x198] sm:$0xff]
    %v705 = vld [vmem:[#allocation11 + $0x1a0] sm:$0xff]
    %v706 = vld [vmem:[#allocation11 + $0x1a8] sm:$0xff]
    %v707 = vld [vmem:[#allocation11 + $0x1b0] sm:$0xff]
    %v708 = vld [vmem:[#allocation11 + $0x1b8] sm:$0xff]
    %v709 = vld [vmem:[#allocation11 + $0x1c0] sm:$0xff]
    %v710 = vld [vmem:[#allocation11 + $0x1c8] sm:$0xff]
    %v711 = vld [vmem:[#allocation11 + $0x1d0] sm:$0xff]
    %v712 = vld [vmem:[#allocation11 + $0x1d8] sm:$0xff]
    %v713 = vld [vmem:[#allocation11 + $0x1e0] sm:$0xff]
    %v714 = vld [vmem:[#allocation11 + $0x1e8] sm:$0xff]
    %v715 = vld [vmem:[#allocation11 + $0x1f0] sm:$0xff]
    %v716 = vld [vmem:[#allocation11 + $0x1f8] sm:$0xff]
    %v717 = vld [vmem:[%s8] sm:$0x3]
    %v719 = vlaneseq
    %v720 = vshrl.u32 %v719, 7
    %v721 = vsub.s32 0, %v720
    %v722 = vrot.slane %v717, %v721
    %v723 = vlaneseq
    %v724 = vshrl.u32 %v723, 7
    %v725 = vsub.s32 1, %v724
    %v726 = vrot.slane %v717, %v725
    %729 = vmatprep.subr.mxu0 %v654
    %730 = vmatpush1.msra.mxu0 %v653
    %731 = vmatprep.subr.mxu0 %v656
    %732 = vmatpush1.msra.mxu0 %v655
    %733 = vmatprep.subr.mxu0 %v658
    %734 = vmatpush1.msra.mxu0 %v657
    %735 = vmatprep.subr.mxu0 %v660
    %736 = vmatpush1.msra.mxu0 %v659
    %737 = vmatprep.subr.mxu0 %v662
    %738 = vmatpush1.msra.mxu0 %v661
    %739 = vmatprep.subr.mxu0 %v664
    %740 = vmatpush1.msra.mxu0 %v663
    %741 = vmatprep.subr.mxu0 %v666
    %742 = vmatpush1.msra.mxu0 %v665
    %743 = vmatprep.subr.mxu0 %v668
    %744 = vmatpush1.msra.mxu0 %v667
    %745 = vmatprep.subr.mxu0 %v670
    %746 = vmatpush1.msra.mxu0 %v669
    %747 = vmatprep.subr.mxu0 %v672
    %748 = vmatpush1.msra.mxu0 %v671
    %749 = vmatprep.subr.mxu0 %v674
    %750 = vmatpush1.msra.mxu0 %v673
    %751 = vmatprep.subr.mxu0 %v676
    %752 = vmatpush1.msra.mxu0 %v675
    %753 = vmatprep.subr.mxu0 %v678
    %754 = vmatpush1.msra.mxu0 %v677
    %755 = vmatprep.subr.mxu0 %v680
    %756 = vmatpush1.msra.mxu0 %v679
    %757 = vmatprep.subr.mxu0 %v682
    %758 = vmatpush1.msra.mxu0 %v681
    %759 = vmatprep.subr.mxu0 %v684
    %760 = vmatpush1.msra.mxu0 %v683
    %761 = vmatprep.subr.mxu0 %v686
    %762 = vmatpush1.msra.mxu0 %v685
    %763 = vmatprep.subr.mxu0 %v688
    %764 = vmatpush1.msra.mxu0 %v687
    %765 = vmatprep.subr.mxu0 %v690
    %766 = vmatpush1.msra.mxu0 %v689
    %767 = vmatprep.subr.mxu0 %v692
    %768 = vmatpush1.msra.mxu0 %v691
    %769 = vmatprep.subr.mxu0 %v694
    %770 = vmatpush1.msra.mxu0 %v693
    %771 = vmatprep.subr.mxu0 %v696
    %772 = vmatpush1.msra.mxu0 %v695
    %773 = vmatprep.subr.mxu0 %v698
    %774 = vmatpush1.msra.mxu0 %v697
    %775 = vmatprep.subr.mxu0 %v700
    %776 = vmatpush1.msra.mxu0 %v699
    %777 = vmatprep.subr.mxu0 %v702
    %778 = vmatpush1.msra.mxu0 %v701
    %779 = vmatprep.subr.mxu0 %v704
    %780 = vmatpush1.msra.mxu0 %v703
    %781 = vmatprep.subr.mxu0 %v706
    %782 = vmatpush1.msra.mxu0 %v705
    %783 = vmatprep.subr.mxu0 %v708
    %784 = vmatpush1.msra.mxu0 %v707
    %785 = vmatprep.subr.mxu0 %v710
    %786 = vmatpush1.msra.mxu0 %v709
    %787 = vmatprep.subr.mxu0 %v712
    %788 = vmatpush1.msra.mxu0 %v711
    %789 = vmatprep.subr.mxu0 %v714
    %790 = vmatpush1.msra.mxu0 %v713
    %791 = vmatprep.subr.mxu0 %v716
    %792 = vmatpush1.msra.mxu0 %v715
    %793 = vmatprep.mubr.f32.mxu0 %v646
    %794 = vmatmul.mubr.f32.gmra.mrb[0].mxu0 %v645
    %v795 = vpop.f32.mrb[0].mxu0
    %v796 = vadd.f32 %v722, %v795
    %v797 = vpop.f32.mrb[0].mxu0
    %v798 = vadd.f32 %v726, %v797
    %799 = vmatprep.mubr.f32.mxu0 %v648
    %800 = vmatmul.mubr.f32.gmra.mrb[0].mxu0 %v647
    %v801 = vpop.f32.mrb[0].mxu0
    %v802 = vadd.f32 %v722, %v801
    %v803 = vpop.f32.mrb[0].mxu0
    %v804 = vadd.f32 %v726, %v803
    %805 = vmatprep.mubr.f32.mxu0 %v650
    %806 = vmatmul.mubr.f32.gmra.mrb[0].mxu0 %v649
    %v807 = vpop.f32.mrb[0].mxu0
    %v808 = vadd.f32 %v722, %v807
    %v809 = vpop.f32.mrb[0].mxu0
    %v810 = vadd.f32 %v726, %v809
    %811 = vmatprep.mubr.f32.mxu0 %v652
    %812 = vmatmul.mubr.f32.gmra.mrb[0].mxu0 %v651
    %v813 = vpop.f32.mrb[0].mxu0
    %v814 = vadd.f32 %v722, %v813
    %v815 = vpop.f32.mrb[0].mxu0
    %v816 = vadd.f32 %v726, %v815
    %817 = vdwg.mxu0
    %v818 = vmax.f32 %v796, 0.0
    %v819 = vmax.f32 %v798, 0.0
    %v820 = vmax.f32 %v802, 0.0
    %v821 = vmax.f32 %v804, 0.0
    %v822 = vmax.f32 %v808, 0.0
    %v823 = vmax.f32 %v810, 0.0
    %v824 = vmax.f32 %v814, 0.0
    %v825 = vmax.f32 %v816, 0.0
    %s826 = sld [smem:[#allocation2]]
    %s827 = sxor.u32 %s826, 2147483648
    %v828 = vstv %s827
    %v829 = vmul.f32 %v828, 1.442695
    %v830 = vpow.pop %v829
    %s831 = vtos %v830
    %s832 = sadd.f32 %s831, 1.0
    %v833 = vstv %s832
    %v834 = vrcp.pop %v833
    %s835 = vtos %v834
    %v836 = vstv %s835
    %v837 = vmul.f32 %v836, %v818
    %v838 = vmul.f32 %v836, %v819
    %v839 = vmul.f32 %v836, %v820
    %v840 = vmul.f32 %v836, %v821
    %v841 = vmul.f32 %v836, %v822
    %v842 = vmul.f32 %v836, %v823
    %v843 = vmul.f32 %v836, %v824
    %v844 = vmul.f32 %v836, %v825
    %v845 = vld [vmem:[#allocation12] sm:$0xff]
    %v846 = vld [vmem:[#allocation12 + $0x8] sm:$0xff]
    %v847 = vld [vmem:[#allocation12 + $0x10] sm:$0xff]
    %v848 = vld [vmem:[#allocation12 + $0x18] sm:$0xff]
    %v849 = vld [vmem:[#allocation12 + $0x20] sm:$0xff]
    %v850 = vld [vmem:[#allocation12 + $0x28] sm:$0xff]
    %v851 = vld [vmem:[#allocation12 + $0x30] sm:$0xff]
    %v852 = vld [vmem:[#allocation12 + $0x38] sm:$0xff]
    %v853 = vld [vmem:[#allocation12 + $0x40] sm:$0xff]
    %v854 = vld [vmem:[#allocation12 + $0x48] sm:$0xff]
    %v855 = vld [vmem:[#allocation12 + $0x50] sm:$0xff]
    %v856 = vld [vmem:[#allocation12 + $0x58] sm:$0xff]
    %v857 = vld [vmem:[#allocation12 + $0x60] sm:$0xff]
    %v858 = vld [vmem:[#allocation12 + $0x68] sm:$0xff]
    %v859 = vld [vmem:[#allocation12 + $0x70] sm:$0xff]
    %v860 = vld [vmem:[#allocation12 + $0x78] sm:$0xff]
    %v861 = vld [vmem:[#allocation12 + $0x80] sm:$0xff]
    %v862 = vld [vmem:[#allocation12 + $0x88] sm:$0xff]
    %v863 = vld [vmem:[#allocation12 + $0x90] sm:$0xff]
    %v864 = vld [vmem:[#allocation12 + $0x98] sm:$0xff]
    %v865 = vld [vmem:[#allocation12 + $0xa0] sm:$0xff]
    %v866 = vld [vmem:[#allocation12 + $0xa8] sm:$0xff]
    %v867 = vld [vmem:[#allocation12 + $0xb0] sm:$0xff]
    %v868 = vld [vmem:[#allocation12 + $0xb8] sm:$0xff]
    %v869 = vld [vmem:[#allocation12 + $0xc0] sm:$0xff]
    %v870 = vld [vmem:[#allocation12 + $0xc8] sm:$0xff]
    %v871 = vld [vmem:[#allocation12 + $0xd0] sm:$0xff]
    %v872 = vld [vmem:[#allocation12 + $0xd8] sm:$0xff]
    %v873 = vld [vmem:[#allocation12 + $0xe0] sm:$0xff]
    %v874 = vld [vmem:[#allocation12 + $0xe8] sm:$0xff]
    %v875 = vld [vmem:[#allocation12 + $0xf0] sm:$0xff]
    %v876 = vld [vmem:[#allocation12 + $0xf8] sm:$0xff]
    %s877 = ssub.f32 1.0, %s835
    %v878 = vstv %s877
    %v879 = vmul.f32 %v878, %v445
    %v880 = vmul.f32 %v878, %v446
    %v881 = vmul.f32 %v878, %v448
    %v882 = vmul.f32 %v878, %v449
    %v883 = vmul.f32 %v878, %v451
    %v884 = vmul.f32 %v878, %v452
    %v885 = vmul.f32 %v878, %v454
    %v886 = vmul.f32 %v878, %v455
    %v887 = vld [vmem:[#allocation14] sm:$0xff]
    %v888 = vld [vmem:[#allocation14 + $0x8] sm:$0xff]
    %v889 = vld [vmem:[#allocation14 + $0x10] sm:$0xff]
    %v890 = vld [vmem:[#allocation14 + $0x18] sm:$0xff]
    %v891 = vld [vmem:[#allocation14 + $0x20] sm:$0xff]
    %v892 = vld [vmem:[#allocation14 + $0x28] sm:$0xff]
    %v893 = vld [vmem:[#allocation14 + $0x30] sm:$0xff]
    %v894 = vld [vmem:[#allocation14 + $0x38] sm:$0xff]
    %v895 = vld [vmem:[#allocation14 + $0x40] sm:$0xff]
    %v896 = vld [vmem:[#allocation14 + $0x48] sm:$0xff]
    %v897 = vld [vmem:[#allocation14 + $0x50] sm:$0xff]
    %v898 = vld [vmem:[#allocation14 + $0x58] sm:$0xff]
    %v899 = vld [vmem:[#allocation14 + $0x60] sm:$0xff]
    %v900 = vld [vmem:[#allocation14 + $0x68] sm:$0xff]
    %v901 = vld [vmem:[#allocation14 + $0x70] sm:$0xff]
    %v902 = vld [vmem:[#allocation14 + $0x78] sm:$0xff]
    %v903 = vld [vmem:[#allocation14 + $0x80] sm:$0xff]
    %v904 = vld [vmem:[#allocation14 + $0x88] sm:$0xff]
    %v905 = vld [vmem:[#allocation14 + $0x90] sm:$0xff]
    %v906 = vld [vmem:[#allocation14 + $0x98] sm:$0xff]
    %v907 = vld [vmem:[#allocation14 + $0xa0] sm:$0xff]
    %v908 = vld [vmem:[#allocation14 + $0xa8] sm:$0xff]
    %v909 = vld [vmem:[#allocation14 + $0xb0] sm:$0xff]
    %v910 = vld [vmem:[#allocation14 + $0xb8] sm:$0xff]
    %v911 = vld [vmem:[#allocation14 + $0xc0] sm:$0xff]
    %v912 = vld [vmem:[#allocation14 + $0xc8] sm:$0xff]
    %v913 = vld [vmem:[#allocation14 + $0xd0] sm:$0xff]
    %v914 = vld [vmem:[#allocation14 + $0xd8] sm:$0xff]
    %v915 = vld [vmem:[#allocation14 + $0xe0] sm:$0xff]
    %v916 = vld [vmem:[#allocation14 + $0xe8] sm:$0xff]
    %v917 = vld [vmem:[#allocation14 + $0xf0] sm:$0xff]
    %v918 = vld [vmem:[#allocation14 + $0xf8] sm:$0xff]
    %919 = vmatprep.subr.mxu0 0.0
    %920 = vmatpush1.msra.mxu0 %v887
    %921 = vmatprep.subr.mxu0 0.0
    %922 = vmatpush1.msra.mxu0 %v888
    %923 = vmatprep.subr.mxu0 0.0
    %924 = vmatpush1.msra.mxu0 %v889
    %925 = vmatprep.subr.mxu0 0.0
    %926 = vmatpush1.msra.mxu0 %v890
    %927 = vmatprep.subr.mxu0 0.0
    %928 = vmatpush1.msra.mxu0 %v891
    %929 = vmatprep.subr.mxu0 0.0
    %930 = vmatpush1.msra.mxu0 %v892
    %931 = vmatprep.subr.mxu0 0.0
    %932 = vmatpush1.msra.mxu0 %v893
    %933 = vmatprep.subr.mxu0 0.0
    %934 = vmatpush1.msra.mxu0 %v894
    %935 = vmatprep.subr.mxu0 0.0
    %936 = vmatpush1.msra.mxu0 %v895
    %937 = vmatprep.subr.mxu0 0.0
    %938 = vmatpush1.msra.mxu0 %v896
    %939 = vmatprep.subr.mxu0 0.0
    %940 = vmatpush1.msra.mxu0 %v897
    %941 = vmatprep.subr.mxu0 0.0
    %942 = vmatpush1.msra.mxu0 %v898
    %943 = vmatprep.subr.mxu0 0.0
    %944 = vmatpush1.msra.mxu0 %v899
    %945 = vmatprep.subr.mxu0 0.0
    %946 = vmatpush1.msra.mxu0 %v900
    %947 = vmatprep.subr.mxu0 0.0
    %948 = vmatpush1.msra.mxu0 %v901
    %949 = vmatprep.subr.mxu0 0.0
    %950 = vmatpush1.msra.mxu0 %v902
    %951 = vmatprep.subr.mxu0 0.0
    %952 = vmatpush1.msra.mxu0 %v903
    %953 = vmatprep.subr.mxu0 0.0
    %954 = vmatpush1.msra.mxu0 %v904
    %955 = vmatprep.subr.mxu0 0.0
    %956 = vmatpush1.msra.mxu0 %v905
    %957 = vmatprep.subr.mxu0 0.0
    %958 = vmatpush1.msra.mxu0 %v906
    %959 = vmatprep.subr.mxu0 0.0
    %960 = vmatpush1.msra.mxu0 %v907
    %961 = vmatprep.subr.mxu0 0.0
    %962 = vmatpush1.msra.mxu0 %v908
    %963 = vmatprep.subr.mxu0 0.0
    %964 = vmatpush1.msra.mxu0 %v909
    %965 = vmatprep.subr.mxu0 0.0
    %966 = vmatpush1.msra.mxu0 %v910
    %967 = vmatprep.subr.mxu0 0.0
    %968 = vmatpush1.msra.mxu0 %v911
    %969 = vmatprep.subr.mxu0 0.0
    %970 = vmatpush1.msra.mxu0 %v912
    %971 = vmatprep.subr.mxu0 0.0
    %972 = vmatpush1.msra.mxu0 %v913
    %973 = vmatprep.subr.mxu0 0.0
    %974 = vmatpush1.msra.mxu0 %v914
    %975 = vmatprep.subr.mxu0 0.0
    %976 = vmatpush1.msra.mxu0 %v915
    %977 = vmatprep.subr.mxu0 0.0
    %978 = vmatpush1.msra.mxu0 %v916
    %979 = vmatprep.subr.mxu0 0.0
    %980 = vmatpush1.msra.mxu0 %v917
    %981 = vmatprep.subr.mxu0 0.0
    %982 = vmatpush1.msra.mxu0 %v918
    %983 = vmatprep.mubr.f32.mxu0 %v880
    %984 = vmatmul.mubr.f32.gmra.mrb[0].mxu0 %v879
    %v985 = vpop.f32.mrb[0].mxu0
    %v986 = vadd.f32 0.0, %v985
    %v987 = vpop.f32.mrb[0].mxu0
    %988 = vmatprep.mubr.f32.mxu0 %v882
    %989 = vmatmul.mubr.f32.gmra.mrb[0].mxu0 %v881
    %v990 = vpop.f32.mrb[0].mxu0
    %v991 = vadd.f32 0.0, %v990
    %v992 = vpop.f32.mrb[0].mxu0
    %993 = vmatprep.mubr.f32.mxu0 %v884
    %994 = vmatmul.mubr.f32.gmra.mrb[0].mxu0 %v883
    %v995 = vpop.f32.mrb[0].mxu0
    %v996 = vadd.f32 0.0, %v995
    %v997 = vpop.f32.mrb[0].mxu0
    %998 = vmatprep.mubr.f32.mxu0 %v886
    %999 = vmatmul.mubr.f32.gmra.mrb[0].mxu0 %v885
    %v1000 = vpop.f32.mrb[0].mxu0
    %v1001 = vadd.f32 0.0, %v1000
    %v1002 = vpop.f32.mrb[0].mxu0
    %1003 = vdwg.mxu0
    %1004 = vmatprep.subr.mxu0 0.0
    %1005 = vmatpush1.msra.mxu0 %v845
    %1006 = vmatprep.subr.mxu0 0.0
    %1007 = vmatpush1.msra.mxu0 %v846
    %1008 = vmatprep.subr.mxu0 0.0
    %1009 = vmatpush1.msra.mxu0 %v847
    %1010 = vmatprep.subr.mxu0 0.0
    %1011 = vmatpush1.msra.mxu0 %v848
    %1012 = vmatprep.subr.mxu0 0.0
    %1013 = vmatpush1.msra.mxu0 %v849
    %1014 = vmatprep.subr.mxu0 0.0
    %1015 = vmatpush1.msra.mxu0 %v850
    %1016 = vmatprep.subr.mxu0 0.0
    %1017 = vmatpush1.msra.mxu0 %v851
    %1018 = vmatprep.subr.mxu0 0.0
    %1019 = vmatpush1.msra.mxu0 %v852
    %1020 = vmatprep.subr.mxu0 0.0
    %1021 = vmatpush1.msra.mxu0 %v853
    %1022 = vmatprep.subr.mxu0 0.0
    %1023 = vmatpush1.msra.mxu0 %v854
    %1024 = vmatprep.subr.mxu0 0.0
    %1025 = vmatpush1.msra.mxu0 %v855
    %1026 = vmatprep.subr.mxu0 0.0
    %1027 = vmatpush1.msra.mxu0 %v856
    %1028 = vmatprep.subr.mxu0 0.0
    %1029 = vmatpush1.msra.mxu0 %v857
    %1030 = vmatprep.subr.mxu0 0.0
    %1031 = vmatpush1.msra.mxu0 %v858
    %1032 = vmatprep.subr.mxu0 0.0
    %1033 = vmatpush1.msra.mxu0 %v859
    %1034 = vmatprep.subr.mxu0 0.0
    %1035 = vmatpush1.msra.mxu0 %v860
    %1036 = vmatprep.subr.mxu0 0.0
    %1037 = vmatpush1.msra.mxu0 %v861
    %1038 = vmatprep.subr.mxu0 0.0
    %1039 = vmatpush1.msra.mxu0 %v862
    %1040 = vmatprep.subr.mxu0 0.0
    %1041 = vmatpush1.msra.mxu0 %v863
    %1042 = vmatprep.subr.mxu0 0.0
    %1043 = vmatpush1.msra.mxu0 %v864
    %1044 = vmatprep.subr.mxu0 0.0
    %1045 = vmatpush1.msra.mxu0 %v865
    %1046 = vmatprep.subr.mxu0 0.0
    %1047 = vmatpush1.msra.mxu0 %v866
    %1048 = vmatprep.subr.mxu0 0.0
    %1049 = vmatpush1.msra.mxu0 %v867
    %1050 = vmatprep.subr.mxu0 0.0
    %1051 = vmatpush1.msra.mxu0 %v868
    %1052 = vmatprep.subr.mxu0 0.0
    %1053 = vmatpush1.msra.mxu0 %v869
    %1054 = vmatprep.subr.mxu0 0.0
    %1055 = vmatpush1.msra.mxu0 %v870
    %1056 = vmatprep.subr.mxu0 0.0
    %1057 = vmatpush1.msra.mxu0 %v871
    %1058 = vmatprep.subr.mxu0 0.0
    %1059 = vmatpush1.msra.mxu0 %v872
    %1060 = vmatprep.subr.mxu0 0.0
    %1061 = vmatpush1.msra.mxu0 %v873
    %1062 = vmatprep.subr.mxu0 0.0
    %1063 = vmatpush1.msra.mxu0 %v874
    %1064 = vmatprep.subr.mxu0 0.0
    %1065 = vmatpush1.msra.mxu0 %v875
    %1066 = vmatprep.subr.mxu0 0.0
    %1067 = vmatpush1.msra.mxu0 %v876
    %1068 = vmatprep.mubr.f32.mxu0 %v838
    %1069 = vmatmul.mubr.f32.gmra.mrb[0].mxu0 %v837
    %v1070 = vpop.f32.mrb[0].mxu0
    %v1071 = vadd.f32 %v986, %v1070
    %v1072 = vpop.f32.mrb[0].mxu0
    %1073 = vmatprep.mubr.f32.mxu0 %v840
    %1074 = vmatmul.mubr.f32.gmra.mrb[0].mxu0 %v839
    %v1075 = vpop.f32.mrb[0].mxu0
    %v1076 = vadd.f32 %v991, %v1075
    %v1077 = vpop.f32.mrb[0].mxu0
    %1078 = vmatprep.mubr.f32.mxu0 %v842
    %1079 = vmatmul.mubr.f32.gmra.mrb[0].mxu0 %v841
    %v1080 = vpop.f32.mrb[0].mxu0
    %v1081 = vadd.f32 %v996, %v1080
    %v1082 = vpop.f32.mrb[0].mxu0
    %1083 = vmatprep.mubr.f32.mxu0 %v844
    %1084 = vmatmul.mubr.f32.gmra.mrb[0].mxu0 %v843
    %v1085 = vpop.f32.mrb[0].mxu0
    %v1086 = vadd.f32 %v1001, %v1085
    %v1087 = vpop.f32.mrb[0].mxu0
    %1088 = vdwg.mxu0
    %v1089 = vld [vmem:[%s10] sm:$0x1]
    %v1090 = vmul.f32 %v836, %v1089
    %v1091 = vld [vmem:[%s12] sm:$0x1]
    %v1092 = vmul.f32 %v878, %v1091
    %v1093 = vadd.f32 %v1090, %v1092
    %v1095 = vlaneseq
    %v1096 = vshrl.u32 %v1095, 7
    %v1097 = vsub.s32 0, %v1096
    %v1098 = vrot.slane %v1093, %v1097
    %v1100 = vadd.f32 %v1071, %v1098
    %v1101 = vadd.f32 %v1076, %v1098
    %v1102 = vadd.f32 %v1081, %v1098
    %v1103 = vadd.f32 %v1086, %v1098
    %1104 = vst [vmem:[#allocation15] sm:$0xff] %v1100
    %1105 = vst [vmem:[#allocation15 + $0x8] sm:$0xff] %v1101
    %1106 = vst [vmem:[#allocation15 + $0x10] sm:$0xff] %v1102
    %1107 = vst [vmem:[#allocation15 + $0x18] sm:$0xff] %v1103
    // Predicated region
    $region82: #{tpu_custom_call.1} parent=1 // pred_check
      _
    $region83: #{tpu_custom_call.1} parent=1 // pred_check_branch
      %1109 = sbr.rel (0) target = $region85
    $region84: #{tpu_custom_call.1} parent=1 // pred_region
      %s1111 = ssub.s32 512, 512
      %1112 = vsyncadd [#allocation5], %s1111
      %s1113 = sshll.u32 [#allocation15], 4
      %s1114 = int_to_ptr.vmem [resolvable:$true] %s1113
      %1119 = dma.vmem_to_hbm [thread:$0]  %s1114, 512, %s13, [#allocation5], 128, 128, 8
    $region85: #{tpu_custom_call.1} parent=1 // pred_fallthru
      _
    // Predicated region
    $region86: #{tpu_custom_call.1} parent=1 // pred_check
      _
    $region87: #{tpu_custom_call.1} parent=1 // pred_check_branch
      %1121 = sbr.rel (0) target = $region89
    $region88: #{tpu_custom_call.1} parent=1 // pred_region
      %1122 = dma.done [#allocation5], 512
    $region89: #{tpu_custom_call.1} parent=1 // pred_fallthru
      _
    %1123 = vsyncpa [#allocation4], 1
    %1124 = vsyncpa [#allocation7], 1
    %1125 = vsyncpa [#allocation10], 1
    %1126 = vsyncpa [#allocation13], 1
    %1127 = vsyncpa [#allocation5], 1

</llo_original>
